<compile_context>
chip_gen: v6e
topology: v6e:2x2x1
jax: 0.10.0
libtpu: 0.0.40
codegen_flags: <defaults>
</compile_context>

<pallas_src>
import functools

import jax
import jax.numpy as jnp
from jax import lax
from jax.experimental import pallas as pl
from jax.experimental.pallas import tpu as pltpu

_LANE = 128


def _query_vmem_capacity():
    try:
        return int(pltpu.get_tpu_info().vmem_capacity_bytes)
    except Exception:
        return 64 * 1024 * 1024          # conservative fallback (v7x-sized)


_VMEM_CAP = _query_vmem_capacity()
# Leave >= 24 MiB of headroom for Pallas double buffers; never ask > 100 MiB.
_VMEM_LIMIT = max(32 * 1024 * 1024,
                  min(_VMEM_CAP * 3 // 4,
                      _VMEM_CAP - 24 * 1024 * 1024,
                      100 * 1024 * 1024))
_TM_CAP = 1024 if _VMEM_CAP >= 100 * 1024 * 1024 else 512


# ----------------------- small helpers -----------------------

def _round_up(x, m):
    return ((x + m - 1) // m) * m


def _pick_tm(m, cap=_TM_CAP):
    """Largest multiple of 8 <= cap dividing m (no padding); else pad m."""
    start = min(cap, m)
    start -= start % 8
    for tm in range(start, 7, -8):
        if m % tm == 0:
            return tm, m
    tm = min(cap, 256)
    return tm, _round_up(m, tm)


def _pad2d(x, rows, cols):
    r, c = x.shape
    if r == rows and c == cols:
        return x
    return jnp.pad(x, ((0, rows - r), (0, cols - c)))


def _pad_vec(v, n):
    return jnp.pad(v, (0, n - v.shape[0])).reshape(1, n)


def _affine(s, q, count, gamma, beta, eps):
    """scale/shift so y*scale+shift == gamma*(y-mean)/sqrt(var+eps)+beta."""
    mean = s / count
    var = jnp.maximum(q / count - mean * mean, 0.0)
    scale = gamma * lax.rsqrt(var + eps)
    shift = beta - mean * scale
    return scale, shift


def _reduce_stats(st):
    """Combine per-tile partial stats (nt, 8, n) -> sum (1,n), sumsq (1,n)."""
    s = jnp.sum(st[:, 0, :], axis=0, keepdims=True)
    q = jnp.sum(st[:, 1, :], axis=0, keepdims=True)
    return s, q


def _stat_tile(y):
    """Pack per-tile sum / sum-of-squares of y into an (8, n) lane-dense tile
    (row 0 = sum, row 1 = sumsq, rows 2..7 = 0)."""
    n = y.shape[1]
    ssum = jnp.sum(y, axis=0, keepdims=True)
    ssq = jnp.sum(y * y, axis=0, keepdims=True)
    row = lax.broadcasted_iota(jnp.int32, (8, n), 0)
    return jnp.where(row == 0, ssum, jnp.where(row == 1, ssq, 0.0))


# ----------------------- Pallas kernels -----------------------

def _matmul_stats_kernel(a_ref, w_ref, y_ref, stat_ref):
    """y = a @ w plus per-tile partial sum / sum-of-squares (megacore safe)."""
    y = jnp.dot(a_ref[...], w_ref[...], preferred_element_type=jnp.float32)
    y_ref[...] = y
    stat_ref[0] = _stat_tile(y)


def matmul_stats(a, w, *, tm):
    m, k = a.shape
    _, n = w.shape
    nt = m // tm
    return pl.pallas_call(
        _matmul_stats_kernel,
        out_shape=(jax.ShapeDtypeStruct((m, n), jnp.float32),
                   jax.ShapeDtypeStruct((nt, 8, n), jnp.float32)),
        grid=(nt,),
        in_specs=[pl.BlockSpec((tm, k), lambda i: (i, 0)),
                  pl.BlockSpec((k, n), lambda i: (0, 0))],
        out_specs=(pl.BlockSpec((tm, n), lambda i: (i, 0)),
                   pl.BlockSpec((1, 8, n), lambda i: (i, 0, 0))),
        compiler_params=pltpu.CompilerParams(
            dimension_semantics=("parallel",),
            vmem_limit_bytes=_VMEM_LIMIT),
    )(a, w)


def _make_bn_relu_matmul_stats_kernel(tm, m_true, m_pad):
    """relu(x*scale+shift) @ w, per-tile stats; masks padded rows if any."""
    need_mask = m_pad != m_true

    def kernel(x_ref, scale_ref, shift_ref, w_ref, y_ref, stat_ref):
        a = jnp.maximum(x_ref[...] * scale_ref[...] + shift_ref[...], 0.0)
        if need_mask:
            rows = (pl.program_id(0) * tm
                    + lax.broadcasted_iota(jnp.int32, (tm, 1), 0))
            a = jnp.where(rows < m_true, a, 0.0)
        y = jnp.dot(a, w_ref[...], preferred_element_type=jnp.float32)
        y_ref[...] = y
        stat_ref[0] = _stat_tile(y)

    return kernel


def bn_relu_matmul_stats(x, scale, shift, w, *, m_true, tm):
    m_pad, k = x.shape
    _, n = w.shape
    nt = m_pad // tm
    kernel = _make_bn_relu_matmul_stats_kernel(tm, m_true, m_pad)
    return pl.pallas_call(
        kernel,
        out_shape=(jax.ShapeDtypeStruct((m_pad, n), jnp.float32),
                   jax.ShapeDtypeStruct((nt, 8, n), jnp.float32)),
        grid=(nt,),
        in_specs=[pl.BlockSpec((tm, k), lambda i: (i, 0)),
                  pl.BlockSpec((1, k), lambda i: (0, 0)),
                  pl.BlockSpec((1, k), lambda i: (0, 0)),
                  pl.BlockSpec((k, n), lambda i: (0, 0))],
        out_specs=(pl.BlockSpec((tm, n), lambda i: (i, 0)),
                   pl.BlockSpec((1, 8, n), lambda i: (i, 0, 0))),
        compiler_params=pltpu.CompilerParams(
            dimension_semantics=("parallel",),
            vmem_limit_bytes=_VMEM_LIMIT),
    )(x, scale, shift, w)


def _make_conv3x3_kernel(H, W):
    """bn1+relu applied in-kernel, 3x3/pad=1/stride=1 conv.

    The 3 kw-shifted views are concatenated along the lane axis in a VMEM
    buffer so the conv becomes 3 matmuls with K = 3*cin (fills the 256-deep
    MXU on v6e/v7x), plus per-image partial BN2 stats.
    """
    def kernel(y1_ref, scale_ref, shift_ref, w2_ref, y2_ref, stat_ref,
               pad_ref, buf_ref):
        cin = pad_ref.shape[-1]
        cout = w2_ref.shape[-1]

        # Zero the halo buffer every step: cheap, and keeps the N grid axis
        # correct under core-parallel (megacore) execution.
        pad_ref[...] = jnp.zeros_like(pad_ref)

        # normalize + relu this image's pre-BN activation; write interior.
        a = jnp.maximum(y1_ref[0] * scale_ref[...] + shift_ref[...], 0.0)
        pad_ref[pl.ds(1, H), pl.ds(1, W), :] = a

        # Concatenate the 3 kw shifts along the lane axis: (H+2, W, 3*cin).
        for kw in range(3):
            buf_ref[:, :, pl.ds(kw * cin, cin)] = pad_ref[:, pl.ds(kw, W), :]

        acc = jnp.zeros((H * W, cout), jnp.float32)
        for kh in range(3):
            patch = buf_ref[pl.ds(kh, H), :, :].reshape(H * W, 3 * cin)
            acc = acc + jnp.dot(patch, w2_ref[kh],
                                preferred_element_type=jnp.float32)

        y2_ref[0] = acc
        stat_ref[0] = _stat_tile(acc)

    return kernel


def conv3x3_bn_fused(y1_nhwc, scale1, shift1, w2r):
    n, h, w, c1 = y1_nhwc.shape
    c2 = w2r.shape[-1]
    kernel = _make_conv3x3_kernel(h, w)
    return pl.pallas_call(
        kernel,
        out_shape=(jax.ShapeDtypeStruct((n, h * w, c2), jnp.float32),
                   jax.ShapeDtypeStruct((n, 8, c2), jnp.float32)),
        grid=(n,),
        in_specs=[pl.BlockSpec((1, h, w, c1), lambda i: (i, 0, 0, 0)),
                  pl.BlockSpec((1, c1), lambda i: (0, 0)),
                  pl.BlockSpec((1, c1), lambda i: (0, 0)),
                  pl.BlockSpec((3, 3 * c1, c2), lambda i: (0, 0, 0))],
        out_specs=(pl.BlockSpec((1, h * w, c2), lambda i: (i, 0, 0)),
                   pl.BlockSpec((1, 8, c2), lambda i: (i, 0, 0))),
        scratch_shapes=[pltpu.VMEM((h + 2, w + 2, c1), jnp.float32),
                        pltpu.VMEM((h + 2, w, 3 * c1), jnp.float32)],
        compiler_params=pltpu.CompilerParams(
            dimension_semantics=("parallel",),
            vmem_limit_bytes=_VMEM_LIMIT),
    )(y1_nhwc, scale1, shift1, w2r)


def _bn_add_relu_kernel(y_ref, scale_ref, shift_ref, res_ref, o_ref):
    o_ref[...] = jnp.maximum(
        y_ref[...] * scale_ref[...] + shift_ref[...] + res_ref[...], 0.0)


def bn_add_relu(y, scale, shift, res, *, tm):
    m, n = y.shape
    return pl.pallas_call(
        _bn_add_relu_kernel,
        out_shape=jax.ShapeDtypeStruct((m, n), jnp.float32),
        grid=(m // tm,),
        in_specs=[pl.BlockSpec((tm, n), lambda i: (i, 0)),
                  pl.BlockSpec((1, n), lambda i: (0, 0)),
                  pl.BlockSpec((1, n), lambda i: (0, 0)),
                  pl.BlockSpec((tm, n), lambda i: (i, 0))],
        out_specs=pl.BlockSpec((tm, n), lambda i: (i, 0)),
        compiler_params=pltpu.CompilerParams(
            dimension_semantics=("parallel",),
            vmem_limit_bytes=_VMEM_LIMIT),
    )(y, scale, shift, res)


# ----------------------- parameters -----------------------

def init_block_params(key, in_channels, out_channels, expansion=4):
    oc, ic, ex = out_channels, in_channels, expansion
    ks = jax.random.split(key, 12)
    return {
        "w1": 0.1 * jax.random.normal(ks[0], (oc, ic, 1, 1), jnp.float32),
        "b1": 0.05 * jax.random.normal(ks[1], (oc,), jnp.float32),
        "w2": 0.1 * jax.random.normal(ks[2], (oc, oc, 3, 3), jnp.float32),
        "b2": 0.05 * jax.random.normal(ks[3], (oc,), jnp.float32),
        "w3": 0.1 * jax.random.normal(ks[4], (oc * ex, oc, 1, 1), jnp.float32),
        "b3": 0.05 * jax.random.normal(ks[5], (oc * ex,), jnp.float32),
        "g1": 1.0 + 0.1 * jax.random.normal(ks[6], (oc,), jnp.float32),
        "be1": 0.1 * jax.random.normal(ks[7], (oc,), jnp.float32),
        "g2": 1.0 + 0.1 * jax.random.normal(ks[8], (oc,), jnp.float32),
        "be2": 0.1 * jax.random.normal(ks[9], (oc,), jnp.float32),
        "g3": 1.0 + 0.1 * jax.random.normal(ks[10], (oc * ex,), jnp.float32),
        "be3": 0.1 * jax.random.normal(ks[11], (oc * ex,), jnp.float32),
    }


# ----------------------- forward -----------------------

@functools.partial(jax.jit, static_argnames=("stride",))
def block_forward_pallas(x_nchw, p, stride=1):
    if stride != 1:
        # TODO(synk): stride>1 requires identity_downsample, which the PyTorch
        # module leaves as None; unsupported here.
        raise NotImplementedError(
            "stride must be 1 when identity_downsample is None")
    N, C, H, W = x_nchw.shape
    oc = p["w1"].shape[0]
    exc = p["w3"].shape[0]
    if C != exc:
        raise ValueError("residual add requires in_channels == out_channels*4")
    eps = 1e-5

    Cp = _round_up(C, _LANE)
    ocp = _round_up(oc, _LANE)
    excp = _round_up(exc, _LANE)
    assert Cp == excp  # so the padded input doubles as the residual operand
    M = N * H * W
    tm, Mpad = _pick_tm(M)

    # NCHW -> NHWC -> (M, C), channel-padded to lane width.
    # TODO(synk): the NCHW<->NHWC transposes remain wrapper-side XLA passes.
    x = jnp.transpose(x_nchw, (0, 2, 3, 1)).astype(jnp.float32)
    x2d = x.reshape(M, C)
    x2d_p = _pad2d(x2d, Mpad, Cp)

    # Weights, channel-padded to lane width.  Conv biases are dropped: they
    # are exactly cancelled by training-mode BN mean subtraction.
    w1p = _pad2d(p["w1"].reshape(oc, C).T, Cp, ocp)                  # (Cp, ocp)
    w2r = jnp.pad(jnp.transpose(p["w2"], (2, 3, 1, 0)),              # (3,3,ic,oc)
                  ((0, 0), (0, 0), (0, ocp - oc), (0, ocp - oc)))
    w2r = w2r.reshape(3, 3 * ocp, ocp)                               # (3, 3*ocp, ocp)
    w3p = _pad2d(p["w3"].reshape(exc, oc).T, ocp, excp)              # (ocp, excp)

    g1, b1 = _pad_vec(p["g1"], ocp), _pad_vec(p["be1"], ocp)
    g2, b2 = _pad_vec(p["g2"], ocp), _pad_vec(p["be2"], ocp)
    g3, b3 = _pad_vec(p["g3"], excp), _pad_vec(p["be3"], excp)

    # stage 1: conv1 (1x1) matmul fused with BN1 partial-stat reduction
    y1, st1 = matmul_stats(x2d_p, w1p, tm=tm)
    s1, q1 = _reduce_stats(st1)
    scale1, shift1 = _affine(s1, q1, M, g1, b1, eps)

    # stage 2: bn1+relu fused into the 3x3 conv (no HBM im2col), BN2 stats
    y1_nhwc = y1[:M].reshape(N, H, W, ocp)          # metadata-only when Mpad==M
    y2, st2 = conv3x3_bn_fused(y1_nhwc, scale1, shift1, w2r)
    s2, q2 = _reduce_stats(st2)
    scale2, shift2 = _affine(s2, q2, M, g2, b2, eps)

    # stage 3: bn2+relu fused into conv3 (1x1) matmul, BN3 stats fused
    y2_2d = _pad2d(y2.reshape(M, ocp), Mpad, ocp)   # metadata-only when Mpad==M
    y3, st3 = bn_relu_matmul_stats(y2_2d, scale2, shift2, w3p,
                                   m_true=M, tm=tm)
    s3, q3 = _reduce_stats(st3)
    scale3, shift3 = _affine(s3, q3, M, g3, b3, eps)

    # stage 4: bn3 + residual add + relu; residual reuses the padded input.
    out = bn_add_relu(y3, scale3, shift3, x2d_p, tm=tm)

    out = out[:M, :exc].reshape(N, H, W, exc)
    return jnp.transpose(out, (0, 3, 1, 2))                          # NCHW


# ----------------------- pure-JAX reference -----------------------

def block_forward_ref(x, p, stride=1, eps=1e-5):
    def conv(x, w, b, s, pad):
        y = lax.conv_general_dilated(
            x, w, (s, s), [(pad, pad), (pad, pad)],
            dimension_numbers=("NCHW", "OIHW", "NCHW"))
        return y + b.reshape(1, -1, 1, 1)

    def bn(x, g, be):
        mean = jnp.mean(x, axis=(0, 2, 3), keepdims=True)
        var = jnp.mean((x - mean) ** 2, axis=(0, 2, 3), keepdims=True)
        return ((x - mean) * lax.rsqrt(var + eps) * g.reshape(1, -1, 1, 1)
                + be.reshape(1, -1, 1, 1))

    identity = x
    y = jax.nn.relu(bn(conv(x, p["w1"], p["b1"], 1, 0), p["g1"], p["be1"]))
    y = jax.nn.relu(bn(conv(y, p["w2"], p["b2"], stride, 1), p["g2"], p["be2"]))
    y = bn(conv(y, p["w3"], p["b3"], 1, 0), p["g3"], p["be3"])
    return jax.nn.relu(y + identity)


# ----------------------- main -----------------------

if __name__ == "__main__":
    key = jax.random.PRNGKey(0)
    kx, kp = jax.random.split(key)

    # identity_downsample is None => in_channels == out_channels * 4, stride=1
    in_channels, out_channels, stride = 16, 4, 1
    N, H, W = 2, 8, 8
    x = jax.random.normal(kx, (N, in_channels, H, W), jnp.float32)
    params = init_block_params(kp, in_channels, out_channels)

    out = block_forward_pallas(x, params, stride=stride)
    out = jax.block_until_ready(out)

    ref = block_forward_ref(x, params, stride=stride)
    assert out.shape == (N, out_channels * 4, H, W), out.shape
    assert jnp.allclose(out, ref, atol=2e-4, rtol=2e-4), (
        float(jnp.max(jnp.abs(out - ref))))

    print("KERNEL_OK")
</pallas_src>

<mosaic_0001>
module attributes {stable_mosaic.version = 11 : i64} {
  func.func @_matmul_stats_kernel(%arg0: i32, %arg1: memref<128x128xf32, #tpu.memory_space<vmem>>, %arg2: memref<128x128xf32, #tpu.memory_space<vmem>>, %arg3: memref<128x128xf32, #tpu.memory_space<vmem>>, %arg4: memref<1x8x128xf32, #tpu.memory_space<vmem>>) attributes {dimension_semantics = [#tpu.dimension_semantics<parallel>], iteration_bounds = array<i64: 1>, scalar_prefetch = 0 : i64, scratch_operands = 0 : i64, tpu.core_type = #tpu.core_type<tc>, window_params = [{transform_indices = @transform_0, window_bounds = array<i64: 128, 128>}, {pipeline_mode = #tpu.pipeline_mode<synchronous>, transform_indices = @transform_1, window_bounds = array<i64: 128, 128>}, {transform_indices = @transform_2, window_bounds = array<i64: 128, 128>}, {transform_indices = @transform_3, window_bounds = array<i64: 1, 8, 128>}]} {
    %c0 = arith.constant 0 : index
    %c0_0 = arith.constant 0 : index
    %0 = vector.load %arg1[%c0, %c0_0] : memref<128x128xf32, #tpu.memory_space<vmem>>, vector<128x128xf32>
    %c0_1 = arith.constant 0 : index
    %c0_2 = arith.constant 0 : index
    %1 = vector.load %arg2[%c0_1, %c0_2] : memref<128x128xf32, #tpu.memory_space<vmem>>, vector<128x128xf32>
    %cst = arith.constant dense<0.000000e+00> : vector<128x128xf32>
    %2 = tpu.matmul %0, %1, %cst {dimension_numbers = #tpu.dot_dimension_numbers<[1], [0], [0], [1], [0, 0, 1, 1], [], []>} : vector<128x128xf32>, vector<128x128xf32>, vector<128x128xf32> -> vector<128x128xf32>
    %c0_3 = arith.constant 0 : index
    %c0_4 = arith.constant 0 : index
    %3 = vector.load %arg3[%c0_3, %c0_4] : memref<128x128xf32, #tpu.memory_space<vmem>>, vector<128x128xf32>
    tpu.vector_store %arg3[%c0_3, %c0_4], %2 {strides = array<i32>} : memref<128x128xf32, #tpu.memory_space<vmem>>, vector<128x128xf32>,
    %cst_5 = arith.constant dense<0.000000e+00> : vector<128xf32>
    %4 = vector.multi_reduction <add>, %2, %cst_5 [0] : vector<128x128xf32> to vector<128xf32>
    %5 = vector.shape_cast %4 : vector<128xf32> to vector<1x128xf32>
    %6 = arith.mulf %2, %2 : vector<128x128xf32>
    %cst_6 = arith.constant dense<0.000000e+00> : vector<128xf32>
    %7 = vector.multi_reduction <add>, %6, %cst_6 [0] : vector<128x128xf32> to vector<128xf32>
    %8 = vector.shape_cast %7 : vector<128xf32> to vector<1x128xf32>
    %9 = tpu.iota {dimensions = array<i32: 0>} : vector<8x128xi32>
    %c0_i32 = arith.constant 0 : i32
    %10 = vector.broadcast %c0_i32 : i32 to vector<8x128xi32>
    %11 = arith.cmpi eq, %9, %10 : vector<8x128xi32>
    %c1_i32 = arith.constant 1 : i32
    %12 = vector.broadcast %c1_i32 : i32 to vector<8x128xi32>
    %13 = arith.cmpi eq, %9, %12 : vector<8x128xi32>
    %cst_7 = arith.constant 0.000000e+00 : f32
    %14 = vector.shape_cast %8 : vector<1x128xf32> to vector<1x128xf32>
    %15 = vector.broadcast %14 : vector<1x128xf32> to vector<8x128xf32>
    %16 = vector.broadcast %cst_7 : f32 to vector<8x128xf32>
    %17 = arith.select %13, %15, %16 : vector<8x128xi1>, vector<8x128xf32>
    %18 = vector.shape_cast %5 : vector<1x128xf32> to vector<1x128xf32>
    %19 = vector.broadcast %18 : vector<1x128xf32> to vector<8x128xf32>
    %20 = arith.select %11, %19, %17 : vector<8x128xi1>, vector<8x128xf32>
    %c0_8 = arith.constant 0 : index
    %c0_9 = arith.constant 0 : index
    %c0_10 = arith.constant 0 : index
    %21 = vector.load %arg4[%c0_8, %c0_9, %c0_10] : memref<1x8x128xf32, #tpu.memory_space<vmem>>, vector<1x8x128xf32>
    %22 = vector.shape_cast %21 : vector<1x8x128xf32> to vector<8x128xf32>
    %23 = vector.shape_cast %20 : vector<8x128xf32> to vector<1x8x128xf32>
    tpu.vector_store %arg4[%c0_8, %c0_9, %c0_10], %23 {strides = array<i32>} : memref<1x8x128xf32, #tpu.memory_space<vmem>>, vector<1x8x128xf32>,
    return
  }
  func.func @transform_0(%arg0: i32) -> (i32, i32) {
    %c0_i32 = arith.constant 0 : i32
    %c0_i32_0 = arith.constant 0 : i32
    return %arg0, %c0_i32 : i32, i32
  }
  func.func @transform_1(%arg0: i32) -> (i32, i32) {
    %c0_i32 = arith.constant 0 : i32
    %c0_i32_0 = arith.constant 0 : i32
    %c0_i32_1 = arith.constant 0 : i32
    return %c0_i32, %c0_i32_0 : i32, i32
  }
  func.func @transform_2(%arg0: i32) -> (i32, i32) {
    %c0_i32 = arith.constant 0 : i32
    %c0_i32_0 = arith.constant 0 : i32
    return %arg0, %c0_i32 : i32, i32
  }
  func.func @transform_3(%arg0: i32) -> (i32, i32, i32) {
    %c0_i32 = arith.constant 0 : i32
    %c0_i32_0 = arith.constant 0 : i32
    %c0_i32_1 = arith.constant 0 : i32
    return %arg0, %c0_i32, %c0_i32_0 : i32, i32, i32
  }
}

module attributes {stable_mosaic.version = 11 : i64} {
  func.func @kernel(%arg0: i32, %arg1: memref<1x8x8x128xf32, #tpu.memory_space<vmem>>, %arg2: memref<1x128xf32, #tpu.memory_space<vmem>>, %arg3: memref<1x128xf32, #tpu.memory_space<vmem>>, %arg4: memref<3x384x128xf32, #tpu.memory_space<vmem>>, %arg5: memref<1x64x128xf32, #tpu.memory_space<vmem>>, %arg6: memref<1x8x128xf32, #tpu.memory_space<vmem>>, %arg7: memref<10x10x128xf32, #tpu.memory_space<vmem>>, %arg8: memref<10x8x384xf32, #tpu.memory_space<vmem>>) attributes {dimension_semantics = [#tpu.dimension_semantics<parallel>], iteration_bounds = array<i64: 2>, scalar_prefetch = 0 : i64, scratch_operands = 2 : i64, tpu.core_type = #tpu.core_type<tc>, window_params = [{transform_indices = @transform_0, window_bounds = array<i64: 1, 8, 8, 128>}, {pipeline_mode = #tpu.pipeline_mode<synchronous>, transform_indices = @transform_1, window_bounds = array<i64: 1, 128>}, {pipeline_mode = #tpu.pipeline_mode<synchronous>, transform_indices = @transform_2, window_bounds = array<i64: 1, 128>}, {pipeline_mode = #tpu.pipeline_mode<synchronous>, transform_indices = @transform_3, window_bounds = array<i64: 3, 384, 128>}, {transform_indices = @transform_4, window_bounds = array<i64: 1, 64, 128>}, {transform_indices = @transform_5, window_bounds = array<i64: 1, 8, 128>}]} {
    %cst = arith.constant 0.000000e+00 : f32
    %0 = vector.broadcast %cst : f32 to vector<10x10x128xf32>
    %c0 = arith.constant 0 : index
    %c0_0 = arith.constant 0 : index
    %c0_1 = arith.constant 0 : index
    %1 = vector.load %arg7[%c0, %c0_0, %c0_1] : memref<10x10x128xf32, #tpu.memory_space<vmem>>, vector<10x10x128xf32>
    tpu.vector_store %arg7[%c0, %c0_0, %c0_1], %0 {strides = array<i32>} : memref<10x10x128xf32, #tpu.memory_space<vmem>>, vector<10x10x128xf32>,
    %c0_2 = arith.constant 0 : index
    %c0_3 = arith.constant 0 : index
    %c0_4 = arith.constant 0 : index
    %c0_5 = arith.constant 0 : index
    %2 = vector.load %arg1[%c0_2, %c0_3, %c0_4, %c0_5] : memref<1x8x8x128xf32, #tpu.memory_space<vmem>>, vector<1x8x8x128xf32>
    %3 = vector.shape_cast %2 : vector<1x8x8x128xf32> to vector<8x8x128xf32>
    %c0_6 = arith.constant 0 : index
    %c0_7 = arith.constant 0 : index
    %4 = vector.load %arg2[%c0_6, %c0_7] : memref<1x128xf32, #tpu.memory_space<vmem>>, vector<1x128xf32>
    %5 = vector.shape_cast %4 : vector<1x128xf32> to vector<1x1x128xf32>
    %6 = vector.broadcast %5 : vector<1x1x128xf32> to vector<8x8x128xf32>
    %7 = arith.mulf %3, %6 : vector<8x8x128xf32>
    %c0_8 = arith.constant 0 : index
    %c0_9 = arith.constant 0 : index
    %8 = vector.load %arg3[%c0_8, %c0_9] : memref<1x128xf32, #tpu.memory_space<vmem>>, vector<1x128xf32>
    %9 = vector.shape_cast %8 : vector<1x128xf32> to vector<1x1x128xf32>
    %10 = vector.broadcast %9 : vector<1x1x128xf32> to vector<8x8x128xf32>
    %11 = arith.addf %7, %10 : vector<8x8x128xf32>
    %cst_10 = arith.constant 0.000000e+00 : f32
    %12 = vector.broadcast %cst_10 : f32 to vector<8x8x128xf32>
    %13 = arith.maximumf %11, %12 : vector<8x8x128xf32>
    %c1 = arith.constant 1 : index
    %c1_11 = arith.constant 1 : index
    %c0_12 = arith.constant 0 : index
    %14 = vector.load %arg7[%c1, %c1_11, %c0_12] : memref<10x10x128xf32, #tpu.memory_space<vmem>>, vector<8x8x128xf32>
    tpu.vector_store %arg7[%c1, %c1_11, %c0_12], %13 {strides = array<i32>} : memref<10x10x128xf32, #tpu.memory_space<vmem>>, vector<8x8x128xf32>,
    %c0_13 = arith.constant 0 : index
    %c0_14 = arith.constant 0 : index
    %c0_15 = arith.constant 0 : index
    %15 = vector.load %arg7[%c0_13, %c0_14, %c0_15] : memref<10x10x128xf32, #tpu.memory_space<vmem>>, vector<10x8x128xf32>
    %c0_16 = arith.constant 0 : index
    %c0_17 = arith.constant 0 : index
    %c0_18 = arith.constant 0 : index
    %16 = vector.load %arg8[%c0_16, %c0_17, %c0_18] : memref<10x8x384xf32, #tpu.memory_space<vmem>>, vector<10x8x128xf32>
    tpu.vector_store %arg8[%c0_16, %c0_17, %c0_18], %15 {strides = array<i32>} : memref<10x8x384xf32, #tpu.memory_space<vmem>>, vector<10x8x128xf32>,
    %c0_19 = arith.constant 0 : index
    %c1_20 = arith.constant 1 : index
    %c0_21 = arith.constant 0 : index
    %17 = vector.load %arg7[%c0_19, %c1_20, %c0_21] : memref<10x10x128xf32, #tpu.memory_space<vmem>>, vector<10x8x128xf32>
    %c0_22 = arith.constant 0 : index
    %c0_23 = arith.constant 0 : index
    %c128 = arith.constant 128 : index
    %18 = vector.load %arg8[%c0_22, %c0_23, %c128] : memref<10x8x384xf32, #tpu.memory_space<vmem>>, vector<10x8x128xf32>
    tpu.vector_store %arg8[%c0_22, %c0_23, %c128], %17 {strides = array<i32>} : memref<10x8x384xf32, #tpu.memory_space<vmem>>, vector<10x8x128xf32>,
    %c0_24 = arith.constant 0 : index
    %c2 = arith.constant 2 : index
    %c0_25 = arith.constant 0 : index
    %19 = vector.load %arg7[%c0_24, %c2, %c0_25] : memref<10x10x128xf32, #tpu.memory_space<vmem>>, vector<10x8x128xf32>
    %c0_26 = arith.constant 0 : index
    %c0_27 = arith.constant 0 : index
    %c256 = arith.constant 256 : index
    %20 = vector.load %arg8[%c0_26, %c0_27, %c256] : memref<10x8x384xf32, #tpu.memory_space<vmem>>, vector<10x8x128xf32>
    tpu.vector_store %arg8[%c0_26, %c0_27, %c256], %19 {strides = array<i32>} : memref<10x8x384xf32, #tpu.memory_space<vmem>>, vector<10x8x128xf32>,
    %cst_28 = arith.constant 0.000000e+00 : f32
    %21 = vector.broadcast %cst_28 : f32 to vector<64x128xf32>
    %c0_29 = arith.constant 0 : index
    %c0_30 = arith.constant 0 : index
    %c0_31 = arith.constant 0 : index
    %22 = vector.load %arg8[%c0_29, %c0_30, %c0_31] : memref<10x8x384xf32, #tpu.memory_space<vmem>>, vector<8x8x384xf32>
    %23 = vector.shape_cast %22 : vector<8x8x384xf32> to vector<64x384xf32>
    %c0_32 = arith.constant 0 : index
    %c0_33 = arith.constant 0 : index
    %c0_34 = arith.constant 0 : index
    %24 = vector.load %arg4[%c0_32, %c0_33, %c0_34] : memref<3x384x128xf32, #tpu.memory_space<vmem>>, vector<1x384x128xf32>
    %25 = vector.shape_cast %24 : vector<1x384x128xf32> to vector<384x128xf32>
    %cst_35 = arith.constant dense<0.000000e+00> : vector<64x128xf32>
    %26 = tpu.matmul %23, %25, %cst_35 {dimension_numbers = #tpu.dot_dimension_numbers<[1], [0], [0], [1], [0, 0, 1, 1], [], []>} : vector<64x384xf32>, vector<384x128xf32>, vector<64x128xf32> -> vector<64x128xf32>
    %27 = arith.addf %21, %26 : vector<64x128xf32>
    %c1_36 = arith.constant 1 : index
    %c0_37 = arith.constant 0 : index
    %c0_38 = arith.constant 0 : index
    %28 = vector.load %arg8[%c1_36, %c0_37, %c0_38] : memref<10x8x384xf32, #tpu.memory_space<vmem>>, vector<8x8x384xf32>
    %29 = vector.shape_cast %28 : vector<8x8x384xf32> to vector<64x384xf32>
    %c1_39 = arith.constant 1 : index
    %c0_40 = arith.constant 0 : index
    %c0_41 = arith.constant 0 : index
    %30 = vector.load %arg4[%c1_39, %c0_40, %c0_41] : memref<3x384x128xf32, #tpu.memory_space<vmem>>, vector<1x384x128xf32>
    %31 = vector.shape_cast %30 : vector<1x384x128xf32> to vector<384x128xf32>
    %cst_42 = arith.constant dense<0.000000e+00> : vector<64x128xf32>
    %32 = tpu.matmul %29, %31, %cst_42 {dimension_numbers = #tpu.dot_dimension_numbers<[1], [0], [0], [1], [0, 0, 1, 1], [], []>} : vector<64x384xf32>, vector<384x128xf32>, vector<64x128xf32> -> vector<64x128xf32>
    %33 = arith.addf %27, %32 : vector<64x128xf32>
    %c2_43 = arith.constant 2 : index
    %c0_44 = arith.constant 0 : index
    %c0_45 = arith.constant 0 : index
    %34 = vector.load %arg8[%c2_43, %c0_44, %c0_45] : memref<10x8x384xf32, #tpu.memory_space<vmem>>, vector<8x8x384xf32>
    %35 = vector.shape_cast %34 : vector<8x8x384xf32> to vector<64x384xf32>
    %c2_46 = arith.constant 2 : index
    %c0_47 = arith.constant 0 : index
    %c0_48 = arith.constant 0 : index
    %36 = vector.load %arg4[%c2_46, %c0_47, %c0_48] : memref<3x384x128xf32, #tpu.memory_space<vmem>>, vector<1x384x128xf32>
    %37 = vector.shape_cast %36 : vector<1x384x128xf32> to vector<384x128xf32>
    %cst_49 = arith.constant dense<0.000000e+00> : vector<64x128xf32>
    %38 = tpu.matmul %35, %37, %cst_49 {dimension_numbers = #tpu.dot_dimension_numbers<[1], [0], [0], [1], [0, 0, 1, 1], [], []>} : vector<64x384xf32>, vector<384x128xf32>, vector<64x128xf32> -> vector<64x128xf32>
    %39 = arith.addf %33, %38 : vector<64x128xf32>
    %c0_50 = arith.constant 0 : index
    %c0_51 = arith.constant 0 : index
    %c0_52 = arith.constant 0 : index
    %40 = vector.load %arg5[%c0_50, %c0_51, %c0_52] : memref<1x64x128xf32, #tpu.memory_space<vmem>>, vector<1x64x128xf32>
    %41 = vector.shape_cast %40 : vector<1x64x128xf32> to vector<64x128xf32>
    %42 = vector.shape_cast %39 : vector<64x128xf32> to vector<1x64x128xf32>
    tpu.vector_store %arg5[%c0_50, %c0_51, %c0_52], %42 {strides = array<i32>} : memref<1x64x128xf32, #tpu.memory_space<vmem>>, vector<1x64x128xf32>,
    %cst_53 = arith.constant dense<0.000000e+00> : vector<128xf32>
    %43 = vector.multi_reduction <add>, %39, %cst_53 [0] : vector<64x128xf32> to vector<128xf32>
    %44 = vector.shape_cast %43 : vector<128xf32> to vector<1x128xf32>
    %45 = arith.mulf %39, %39 : vector<64x128xf32>
    %cst_54 = arith.constant dense<0.000000e+00> : vector<128xf32>
    %46 = vector.multi_reduction <add>, %45, %cst_54 [0] : vector<64x128xf32> to vector<128xf32>
    %47 = vector.shape_cast %46 : vector<128xf32> to vector<1x128xf32>
    %48 = tpu.iota {dimensions = array<i32: 0>} : vector<8x128xi32>
    %c0_i32 = arith.constant 0 : i32
    %49 = vector.broadcast %c0_i32 : i32 to vector<8x128xi32>
    %50 = arith.cmpi eq, %48, %49 : vector<8x128xi32>
    %c1_i32 = arith.constant 1 : i32
    %51 = vector.broadcast %c1_i32 : i32 to vector<8x128xi32>
    %52 = arith.cmpi eq, %48, %51 : vector<8x128xi32>
    %cst_55 = arith.constant 0.000000e+00 : f32
    %53 = vector.shape_cast %47 : vector<1x128xf32> to vector<1x128xf32>
    %54 = vector.broadcast %53 : vector<1x128xf32> to vector<8x128xf32>
    %55 = vector.broadcast %cst_55 : f32 to vector<8x128xf32>
    %56 = arith.select %52, %54, %55 : vector<8x128xi1>, vector<8x128xf32>
    %57 = vector.shape_cast %44 : vector<1x128xf32> to vector<1x128xf32>
    %58 = vector.broadcast %57 : vector<1x128xf32> to vector<8x128xf32>
    %59 = arith.select %50, %58, %56 : vector<8x128xi1>, vector<8x128xf32>
    %c0_56 = arith.constant 0 : index
    %c0_57 = arith.constant 0 : index
    %c0_58 = arith.constant 0 : index
    %60 = vector.load %arg6[%c0_56, %c0_57, %c0_58] : memref<1x8x128xf32, #tpu.memory_space<vmem>>, vector<1x8x128xf32>
    %61 = vector.shape_cast %60 : vector<1x8x128xf32> to vector<8x128xf32>
    %62 = vector.shape_cast %59 : vector<8x128xf32> to vector<1x8x128xf32>
    tpu.vector_store %arg6[%c0_56, %c0_57, %c0_58], %62 {strides = array<i32>} : memref<1x8x128xf32, #tpu.memory_space<vmem>>, vector<1x8x128xf32>,
    return
  }
  func.func @transform_0(%arg0: i32) -> (i32, i32, i32, i32) {
    %c0_i32 = arith.constant 0 : i32
    %c0_i32_0 = arith.constant 0 : i32
    %c0_i32_1 = arith.constant 0 : i32
    %c0_i32_2 = arith.constant 0 : i32
    return %arg0, %c0_i32, %c0_i32_0, %c0_i32_1 : i32, i32, i32, i32
  }
  func.func @transform_1(%arg0: i32) -> (i32, i32) {
    %c0_i32 = arith.constant 0 : i32
    %c0_i32_0 = arith.constant 0 : i32
    %c0_i32_1 = arith.constant 0 : i32
    return %c0_i32, %c0_i32_0 : i32, i32
  }
  func.func @transform_2(%arg0: i32) -> (i32, i32) {
    %c0_i32 = arith.constant 0 : i32
    %c0_i32_0 = arith.constant 0 : i32
    %c0_i32_1 = arith.constant 0 : i32
    return %c0_i32, %c0_i32_0 : i32, i32
  }
  func.func @transform_3(%arg0: i32) -> (i32, i32, i32) {
    %c0_i32 = arith.constant 0 : i32
    %c0_i32_0 = arith.constant 0 : i32
    %c0_i32_1 = arith.constant 0 : i32
    %c0_i32_2 = arith.constant 0 : i32
    return %c0_i32, %c0_i32_0, %c0_i32_1 : i32, i32, i32
  }
  func.func @transform_4(%arg0: i32) -> (i32, i32, i32) {
    %c0_i32 = arith.constant 0 : i32
    %c0_i32_0 = arith.constant 0 : i32
    %c0_i32_1 = arith.constant 0 : i32
    return %arg0, %c0_i32, %c0_i32_0 : i32, i32, i32
  }
  func.func @transform_5(%arg0: i32) -> (i32, i32, i32) {
    %c0_i32 = arith.constant 0 : i32
    %c0_i32_0 = arith.constant 0 : i32
    %c0_i32_1 = arith.constant 0 : i32
    return %arg0, %c0_i32, %c0_i32_0 : i32, i32, i32
  }
}

module attributes {stable_mosaic.version = 11 : i64} {
  func.func @_bn_add_relu_kernel(%arg0: i32, %arg1: memref<128x128xf32, #tpu.memory_space<vmem>>, %arg2: memref<1x128xf32, #tpu.memory_space<vmem>>, %arg3: memref<1x128xf32, #tpu.memory_space<vmem>>, %arg4: memref<128x128xf32, #tpu.memory_space<vmem>>, %arg5: memref<128x128xf32, #tpu.memory_space<vmem>>) attributes {dimension_semantics = [#tpu.dimension_semantics<parallel>], iteration_bounds = array<i64: 1>, scalar_prefetch = 0 : i64, scratch_operands = 0 : i64, tpu.core_type = #tpu.core_type<tc>, window_params = [{transform_indices = @transform_0, window_bounds = array<i64: 128, 128>}, {pipeline_mode = #tpu.pipeline_mode<synchronous>, transform_indices = @transform_1, window_bounds = array<i64: 1, 128>}, {pipeline_mode = #tpu.pipeline_mode<synchronous>, transform_indices = @transform_2, window_bounds = array<i64: 1, 128>}, {transform_indices = @transform_3, window_bounds = array<i64: 128, 128>}, {transform_indices = @transform_4, window_bounds = array<i64: 128, 128>}]} {
    %c0 = arith.constant 0 : index
    %c0_0 = arith.constant 0 : index
    %0 = vector.load %arg1[%c0, %c0_0] : memref<128x128xf32, #tpu.memory_space<vmem>>, vector<128x128xf32>
    %c0_1 = arith.constant 0 : index
    %c0_2 = arith.constant 0 : index
    %1 = vector.load %arg2[%c0_1, %c0_2] : memref<1x128xf32, #tpu.memory_space<vmem>>, vector<1x128xf32>
    %2 = vector.broadcast %1 : vector<1x128xf32> to vector<128x128xf32>
    %3 = arith.mulf %0, %2 : vector<128x128xf32>
    %c0_3 = arith.constant 0 : index
    %c0_4 = arith.constant 0 : index
    %4 = vector.load %arg3[%c0_3, %c0_4] : memref<1x128xf32, #tpu.memory_space<vmem>>, vector<1x128xf32>
    %5 = vector.broadcast %4 : vector<1x128xf32> to vector<128x128xf32>
    %6 = arith.addf %3, %5 : vector<128x128xf32>
    %c0_5 = arith.constant 0 : index
    %c0_6 = arith.constant 0 : index
    %7 = vector.load %arg4[%c0_5, %c0_6] : memref<128x128xf32, #tpu.memory_space<vmem>>, vector<128x128xf32>
    %8 = arith.addf %6, %7 : vector<128x128xf32>
    %cst = arith.constant 0.000000e+00 : f32
    %9 = vector.broadcast %cst : f32 to vector<128x128xf32>
    %10 = arith.maximumf %8, %9 : vector<128x128xf32>
    %c0_7 = arith.constant 0 : index
    %c0_8 = arith.constant 0 : index
    %11 = vector.load %arg5[%c0_7, %c0_8] : memref<128x128xf32, #tpu.memory_space<vmem>>, vector<128x128xf32>
    tpu.vector_store %arg5[%c0_7, %c0_8], %10 {strides = array<i32>} : memref<128x128xf32, #tpu.memory_space<vmem>>, vector<128x128xf32>,
    return
  }
  func.func @transform_0(%arg0: i32) -> (i32, i32) {
    %c0_i32 = arith.constant 0 : i32
    %c0_i32_0 = arith.constant 0 : i32
    return %arg0, %c0_i32 : i32, i32
  }
  func.func @transform_1(%arg0: i32) -> (i32, i32) {
    %c0_i32 = arith.constant 0 : i32
    %c0_i32_0 = arith.constant 0 : i32
    %c0_i32_1 = arith.constant 0 : i32
    return %c0_i32, %c0_i32_0 : i32, i32
  }
  func.func @transform_2(%arg0: i32) -> (i32, i32) {
    %c0_i32 = arith.constant 0 : i32
    %c0_i32_0 = arith.constant 0 : i32
    %c0_i32_1 = arith.constant 0 : i32
    return %c0_i32, %c0_i32_0 : i32, i32
  }
  func.func @transform_3(%arg0: i32) -> (i32, i32) {
    %c0_i32 = arith.constant 0 : i32
    %c0_i32_0 = arith.constant 0 : i32
    return %arg0, %c0_i32 : i32, i32
  }
  func.func @transform_4(%arg0: i32) -> (i32, i32) {
    %c0_i32 = arith.constant 0 : i32
    %c0_i32_0 = arith.constant 0 : i32
    return %arg0, %c0_i32 : i32, i32
  }
}

module attributes {stable_mosaic.version = 11 : i64} {
  func.func @kernel(%arg0: i32, %arg1: memref<128x128xf32, #tpu.memory_space<vmem>>, %arg2: memref<1x128xf32, #tpu.memory_space<vmem>>, %arg3: memref<1x128xf32, #tpu.memory_space<vmem>>, %arg4: memref<128x128xf32, #tpu.memory_space<vmem>>, %arg5: memref<128x128xf32, #tpu.memory_space<vmem>>, %arg6: memref<1x8x128xf32, #tpu.memory_space<vmem>>) attributes {dimension_semantics = [#tpu.dimension_semantics<parallel>], iteration_bounds = array<i64: 1>, scalar_prefetch = 0 : i64, scratch_operands = 0 : i64, tpu.core_type = #tpu.core_type<tc>, window_params = [{transform_indices = @transform_0, window_bounds = array<i64: 128, 128>}, {pipeline_mode = #tpu.pipeline_mode<synchronous>, transform_indices = @transform_1, window_bounds = array<i64: 1, 128>}, {pipeline_mode = #tpu.pipeline_mode<synchronous>, transform_indices = @transform_2, window_bounds = array<i64: 1, 128>}, {pipeline_mode = #tpu.pipeline_mode<synchronous>, transform_indices = @transform_3, window_bounds = array<i64: 128, 128>}, {transform_indices = @transform_4, window_bounds = array<i64: 128, 128>}, {transform_indices = @transform_5, window_bounds = array<i64: 1, 8, 128>}]} {
    %c0 = arith.constant 0 : index
    %c0_0 = arith.constant 0 : index
    %0 = vector.load %arg1[%c0, %c0_0] : memref<128x128xf32, #tpu.memory_space<vmem>>, vector<128x128xf32>
    %c0_1 = arith.constant 0 : index
    %c0_2 = arith.constant 0 : index
    %1 = vector.load %arg2[%c0_1, %c0_2] : memref<1x128xf32, #tpu.memory_space<vmem>>, vector<1x128xf32>
    %2 = vector.broadcast %1 : vector<1x128xf32> to vector<128x128xf32>
    %3 = arith.mulf %0, %2 : vector<128x128xf32>
    %c0_3 = arith.constant 0 : index
    %c0_4 = arith.constant 0 : index
    %4 = vector.load %arg3[%c0_3, %c0_4] : memref<1x128xf32, #tpu.memory_space<vmem>>, vector<1x128xf32>
    %5 = vector.broadcast %4 : vector<1x128xf32> to vector<128x128xf32>
    %6 = arith.addf %3, %5 : vector<128x128xf32>
    %cst = arith.constant 0.000000e+00 : f32
    %7 = vector.broadcast %cst : f32 to vector<128x128xf32>
    %8 = arith.maximumf %6, %7 : vector<128x128xf32>
    %c0_5 = arith.constant 0 : index
    %c0_6 = arith.constant 0 : index
    %9 = vector.load %arg4[%c0_5, %c0_6] : memref<128x128xf32, #tpu.memory_space<vmem>>, vector<128x128xf32>
    %cst_7 = arith.constant dense<0.000000e+00> : vector<128x128xf32>
    %10 = tpu.matmul %8, %9, %cst_7 {dimension_numbers = #tpu.dot_dimension_numbers<[1], [0], [0], [1], [0, 0, 1, 1], [], []>} : vector<128x128xf32>, vector<128x128xf32>, vector<128x128xf32> -> vector<128x128xf32>
    %c0_8 = arith.constant 0 : index
    %c0_9 = arith.constant 0 : index
    %11 = vector.load %arg5[%c0_8, %c0_9] : memref<128x128xf32, #tpu.memory_space<vmem>>, vector<128x128xf32>
    tpu.vector_store %arg5[%c0_8, %c0_9], %10 {strides = array<i32>} : memref<128x128xf32, #tpu.memory_space<vmem>>, vector<128x128xf32>,
    %cst_10 = arith.constant dense<0.000000e+00> : vector<128xf32>
    %12 = vector.multi_reduction <add>, %10, %cst_10 [0] : vector<128x128xf32> to vector<128xf32>
    %13 = vector.shape_cast %12 : vector<128xf32> to vector<1x128xf32>
    %14 = arith.mulf %10, %10 : vector<128x128xf32>
    %cst_11 = arith.constant dense<0.000000e+00> : vector<128xf32>
    %15 = vector.multi_reduction <add>, %14, %cst_11 [0] : vector<128x128xf32> to vector<128xf32>
    %16 = vector.shape_cast %15 : vector<128xf32> to vector<1x128xf32>
    %17 = tpu.iota {dimensions = array<i32: 0>} : vector<8x128xi32>
    %c0_i32 = arith.constant 0 : i32
    %18 = vector.broadcast %c0_i32 : i32 to vector<8x128xi32>
    %19 = arith.cmpi eq, %17, %18 : vector<8x128xi32>
    %c1_i32 = arith.constant 1 : i32
    %20 = vector.broadcast %c1_i32 : i32 to vector<8x128xi32>
    %21 = arith.cmpi eq, %17, %20 : vector<8x128xi32>
    %cst_12 = arith.constant 0.000000e+00 : f32
    %22 = vector.shape_cast %16 : vector<1x128xf32> to vector<1x128xf32>
    %23 = vector.broadcast %22 : vector<1x128xf32> to vector<8x128xf32>
    %24 = vector.broadcast %cst_12 : f32 to vector<8x128xf32>
    %25 = arith.select %21, %23, %24 : vector<8x128xi1>, vector<8x128xf32>
    %26 = vector.shape_cast %13 : vector<1x128xf32> to vector<1x128xf32>
    %27 = vector.broadcast %26 : vector<1x128xf32> to vector<8x128xf32>
    %28 = arith.select %19, %27, %25 : vector<8x128xi1>, vector<8x128xf32>
    %c0_13 = arith.constant 0 : index
    %c0_14 = arith.constant 0 : index
    %c0_15 = arith.constant 0 : index
    %29 = vector.load %arg6[%c0_13, %c0_14, %c0_15] : memref<1x8x128xf32, #tpu.memory_space<vmem>>, vector<1x8x128xf32>
    %30 = vector.shape_cast %29 : vector<1x8x128xf32> to vector<8x128xf32>
    %31 = vector.shape_cast %28 : vector<8x128xf32> to vector<1x8x128xf32>
    tpu.vector_store %arg6[%c0_13, %c0_14, %c0_15], %31 {strides = array<i32>} : memref<1x8x128xf32, #tpu.memory_space<vmem>>, vector<1x8x128xf32>,
    return
  }
  func.func @transform_0(%arg0: i32) -> (i32, i32) {
    %c0_i32 = arith.constant 0 : i32
    %c0_i32_0 = arith.constant 0 : i32
    return %arg0, %c0_i32 : i32, i32
  }
  func.func @transform_1(%arg0: i32) -> (i32, i32) {
    %c0_i32 = arith.constant 0 : i32
    %c0_i32_0 = arith.constant 0 : i32
    %c0_i32_1 = arith.constant 0 : i32
    return %c0_i32, %c0_i32_0 : i32, i32
  }
  func.func @transform_2(%arg0: i32) -> (i32, i32) {
    %c0_i32 = arith.constant 0 : i32
    %c0_i32_0 = arith.constant 0 : i32
    %c0_i32_1 = arith.constant 0 : i32
    return %c0_i32, %c0_i32_0 : i32, i32
  }
  func.func @transform_3(%arg0: i32) -> (i32, i32) {
    %c0_i32 = arith.constant 0 : i32
    %c0_i32_0 = arith.constant 0 : i32
    %c0_i32_1 = arith.constant 0 : i32
    return %c0_i32, %c0_i32_0 : i32, i32
  }
  func.func @transform_4(%arg0: i32) -> (i32, i32) {
    %c0_i32 = arith.constant 0 : i32
    %c0_i32_0 = arith.constant 0 : i32
    return %arg0, %c0_i32 : i32, i32
  }
  func.func @transform_5(%arg0: i32) -> (i32, i32, i32) {
    %c0_i32 = arith.constant 0 : i32
    %c0_i32_0 = arith.constant 0 : i32
    %c0_i32_1 = arith.constant 0 : i32
    return %arg0, %c0_i32, %c0_i32_0 : i32, i32, i32
  }
}

</mosaic_0001>

<llo_original>
// kernel: block_forward_pallas.4
$region0: #{block_forward_pallas.4}
  #allocation0 [shape = 'u32[]', space=smem, size = 0x4, offset = 0x4, fixed_abs, tag = 'smem constant byte address 0x4 - core index']
  #allocation1 [shape = 'u32[144,128]{1,0:T(1,128)}', space=vmem, size = 0x12000, scoped, tag = 'internal scratch']
  %s0 = inlined_call_operand.vmem [shape: f32[128,128], index: 0, kind: input, shape index: {}]
  %s1 = inlined_call_operand.vmem [shape: f32[128,128], index: 1, kind: input, shape index: {}]
  %s2 = inlined_call_operand.vmem [shape: f32[128,128], index: 2, kind: output, shape index: {0}]
  %s3 = inlined_call_operand.vmem [shape: f32[1,8,128], index: 3, kind: output, shape index: {1}]
  %4 = xla_tuple %s2, %s3
  %s5 = sld [smem:[#allocation0]]
  $region26: #{block_forward_pallas.4} parent=0
    _
  %s7 = ssub.s32 1, %s5
  %s8 = scalar_select 0, %s7, %s5
  // Predicated region
  $region2: #{block_forward_pallas.4} parent=0 // pred_check
    _
  $region3: #{block_forward_pallas.4} parent=0 // pred_check_branch
    %10 = sbr.rel (0) target = $region5
  $region4: #{block_forward_pallas.4} parent=0 // pred_region
    _
  $region5: #{block_forward_pallas.4} parent=0 // pred_fallthru
    _
  // Predicated region
  $region6: #{block_forward_pallas.4} parent=0 // pred_check
    _
  $region7: #{block_forward_pallas.4} parent=0 // pred_check_branch
    %12 = sbr.rel (0) target = $region9
  $region8: #{block_forward_pallas.4} parent=0 // pred_region
    _
  $region9: #{block_forward_pallas.4} parent=0 // pred_fallthru
    _
  %v13 = vld [vmem:[%s0] sm:$0xff]
  %v14 = vld [vmem:[%s0 + $0x8] sm:$0xff]
  %v15 = vld [vmem:[%s0 + $0x10] sm:$0xff]
  %v16 = vld [vmem:[%s0 + $0x18] sm:$0xff]
  %v17 = vld [vmem:[%s0 + $0x20] sm:$0xff]
  %v18 = vld [vmem:[%s0 + $0x28] sm:$0xff]
  %v19 = vld [vmem:[%s0 + $0x30] sm:$0xff]
  %v20 = vld [vmem:[%s0 + $0x38] sm:$0xff]
  %v21 = vld [vmem:[%s0 + $0x40] sm:$0xff]
  %v22 = vld [vmem:[%s0 + $0x48] sm:$0xff]
  %v23 = vld [vmem:[%s0 + $0x50] sm:$0xff]
  %v24 = vld [vmem:[%s0 + $0x58] sm:$0xff]
  %v25 = vld [vmem:[%s0 + $0x60] sm:$0xff]
  %v26 = vld [vmem:[%s0 + $0x68] sm:$0xff]
  %v27 = vld [vmem:[%s0 + $0x70] sm:$0xff]
  %v28 = vld [vmem:[%s0 + $0x78] sm:$0xff]
  %v29 = vld [vmem:[%s1] sm:$0xff]
  %v30 = vld [vmem:[%s1 + $0x8] sm:$0xff]
  %v31 = vld [vmem:[%s1 + $0x10] sm:$0xff]
  %v32 = vld [vmem:[%s1 + $0x18] sm:$0xff]
  %v33 = vld [vmem:[%s1 + $0x20] sm:$0xff]
  %v34 = vld [vmem:[%s1 + $0x28] sm:$0xff]
  %v35 = vld [vmem:[%s1 + $0x30] sm:$0xff]
  %v36 = vld [vmem:[%s1 + $0x38] sm:$0xff]
  %v37 = vld [vmem:[%s1 + $0x40] sm:$0xff]
  %v38 = vld [vmem:[%s1 + $0x48] sm:$0xff]
  %v39 = vld [vmem:[%s1 + $0x50] sm:$0xff]
  %v40 = vld [vmem:[%s1 + $0x58] sm:$0xff]
  %v41 = vld [vmem:[%s1 + $0x60] sm:$0xff]
  %v42 = vld [vmem:[%s1 + $0x68] sm:$0xff]
  %v43 = vld [vmem:[%s1 + $0x70] sm:$0xff]
  %v44 = vld [vmem:[%s1 + $0x78] sm:$0xff]
  %45 = vmatprep.subr.mxu0 0.0
  %46 = vmatpush1.msra.mxu0 %v44
  %47 = vmatprep.subr.mxu0 0.0
  %48 = vmatpush1.msra.mxu0 %v43
  %49 = vmatprep.subr.mxu0 0.0
  %50 = vmatpush1.msra.mxu0 %v42
  %51 = vmatprep.subr.mxu0 0.0
  %52 = vmatpush1.msra.mxu0 %v41
  %53 = vmatprep.subr.mxu0 0.0
  %54 = vmatpush1.msra.mxu0 %v40
  %55 = vmatprep.subr.mxu0 0.0
  %56 = vmatpush1.msra.mxu0 %v39
  %57 = vmatprep.subr.mxu0 0.0
  %58 = vmatpush1.msra.mxu0 %v38
  %59 = vmatprep.subr.mxu0 0.0
  %60 = vmatpush1.msra.mxu0 %v37
  %61 = vmatprep.subr.mxu0 0.0
  %62 = vmatpush1.msra.mxu0 %v36
  %63 = vmatprep.subr.mxu0 0.0
  %64 = vmatpush1.msra.mxu0 %v35
  %65 = vmatprep.subr.mxu0 0.0
  %66 = vmatpush1.msra.mxu0 %v34
  %67 = vmatprep.subr.mxu0 0.0
  %68 = vmatpush1.msra.mxu0 %v33
  %69 = vmatprep.subr.mxu0 0.0
  %70 = vmatpush1.msra.mxu0 %v32
  %71 = vmatprep.subr.mxu0 0.0
  %72 = vmatpush1.msra.mxu0 %v31
  %73 = vmatprep.subr.mxu0 0.0
  %74 = vmatpush1.msra.mxu0 %v30
  %75 = vmatprep.subr.mxu0 0.0
  %76 = vmatpush1.msra.mxu0 %v29
  %77 = vmatprep.subr.mxu0 0.0
  %78 = vmatpush2.msra.mxu0 0.0
  %79 = vmatprep.subr.mxu0 0.0
  %80 = vmatpush2.msra.mxu0 0.0
  %81 = vmatprep.subr.mxu0 0.0
  %82 = vmatpush2.msra.mxu0 0.0
  %83 = vmatprep.subr.mxu0 0.0
  %84 = vmatpush2.msra.mxu0 0.0
  %85 = vmatprep.subr.mxu0 0.0
  %86 = vmatpush2.msra.mxu0 0.0
  %87 = vmatprep.subr.mxu0 0.0
  %88 = vmatpush2.msra.mxu0 0.0
  %89 = vmatprep.subr.mxu0 0.0
  %90 = vmatpush2.msra.mxu0 0.0
  %91 = vmatprep.subr.mxu0 0.0
  %92 = vmatpush2.msra.mxu0 0.0
  %93 = vmatprep.subr.mxu0 0.0
  %94 = vmatpush2.msra.mxu0 0.0
  %95 = vmatprep.subr.mxu0 0.0
  %96 = vmatpush2.msra.mxu0 0.0
  %97 = vmatprep.subr.mxu0 0.0
  %98 = vmatpush2.msra.mxu0 0.0
  %99 = vmatprep.subr.mxu0 0.0
  %100 = vmatpush2.msra.mxu0 0.0
  %101 = vmatprep.subr.mxu0 0.0
  %102 = vmatpush2.msra.mxu0 0.0
  %103 = vmatprep.subr.mxu0 0.0
  %104 = vmatpush2.msra.mxu0 0.0
  %105 = vmatprep.subr.mxu0 0.0
  %106 = vmatpush2.msra.mxu0 0.0
  %107 = vmatprep.subr.mxu0 0.0
  %108 = vmatpush2.msra.mxu0 0.0
  %109 = vmatprep.mubr.f32.mxu0 0.0
  %110 = vmatmul.mubr.f32.gmra.mxu0 %v13
  %v111 = vpop.f32.mrf.mxu0
  %v112 = vadd.f32 0.0, %v111
  %v113 = vpop.f32.mrf.mxu0
  %114 = vmatprep.mubr.f32.mxu0 0.0
  %115 = vmatmul.mubr.f32.gmra.mxu0 %v14
  %v116 = vpop.f32.mrf.mxu0
  %v117 = vadd.f32 0.0, %v116
  %v118 = vpop.f32.mrf.mxu0
  %119 = vmatprep.mubr.f32.mxu0 0.0
  %120 = vmatmul.mubr.f32.gmra.mxu0 %v15
  %v121 = vpop.f32.mrf.mxu0
  %v122 = vadd.f32 0.0, %v121
  %v123 = vpop.f32.mrf.mxu0
  %124 = vmatprep.mubr.f32.mxu0 0.0
  %125 = vmatmul.mubr.f32.gmra.mxu0 %v16
  %v126 = vpop.f32.mrf.mxu0
  %v127 = vadd.f32 0.0, %v126
  %v128 = vpop.f32.mrf.mxu0
  %129 = vmatprep.mubr.f32.mxu0 0.0
  %130 = vmatmul.mubr.f32.gmra.mxu0 %v17
  %v131 = vpop.f32.mrf.mxu0
  %v132 = vadd.f32 0.0, %v131
  %v133 = vpop.f32.mrf.mxu0
  %134 = vmatprep.mubr.f32.mxu0 0.0
  %135 = vmatmul.mubr.f32.gmra.mxu0 %v18
  %v136 = vpop.f32.mrf.mxu0
  %v137 = vadd.f32 0.0, %v136
  %v138 = vpop.f32.mrf.mxu0
  %139 = vmatprep.mubr.f32.mxu0 0.0
  %140 = vmatmul.mubr.f32.gmra.mxu0 %v19
  %v141 = vpop.f32.mrf.mxu0
  %v142 = vadd.f32 0.0, %v141
  %v143 = vpop.f32.mrf.mxu0
  %144 = vmatprep.mubr.f32.mxu0 0.0
  %145 = vmatmul.mubr.f32.gmra.mxu0 %v20
  %v146 = vpop.f32.mrf.mxu0
  %v147 = vadd.f32 0.0, %v146
  %v148 = vpop.f32.mrf.mxu0
  %149 = vmatprep.mubr.f32.mxu0 0.0
  %150 = vmatmul.mubr.f32.gmra.mxu0 %v21
  %v151 = vpop.f32.mrf.mxu0
  %v152 = vadd.f32 0.0, %v151
  %v153 = vpop.f32.mrf.mxu0
  %154 = vmatprep.mubr.f32.mxu0 0.0
  %155 = vmatmul.mubr.f32.gmra.mxu0 %v22
  %v156 = vpop.f32.mrf.mxu0
  %v157 = vadd.f32 0.0, %v156
  %v158 = vpop.f32.mrf.mxu0
  %159 = vmatprep.mubr.f32.mxu0 0.0
  %160 = vmatmul.mubr.f32.gmra.mxu0 %v23
  %v161 = vpop.f32.mrf.mxu0
  %v162 = vadd.f32 0.0, %v161
  %v163 = vpop.f32.mrf.mxu0
  %164 = vmatprep.mubr.f32.mxu0 0.0
  %165 = vmatmul.mubr.f32.gmra.mxu0 %v24
  %v166 = vpop.f32.mrf.mxu0
  %v167 = vadd.f32 0.0, %v166
  %v168 = vpop.f32.mrf.mxu0
  %169 = vmatprep.mubr.f32.mxu0 0.0
  %170 = vmatmul.mubr.f32.gmra.mxu0 %v25
  %v171 = vpop.f32.mrf.mxu0
  %v172 = vadd.f32 0.0, %v171
  %v173 = vpop.f32.mrf.mxu0
  %174 = vmatprep.mubr.f32.mxu0 0.0
  %175 = vmatmul.mubr.f32.gmra.mxu0 %v26
  %v176 = vpop.f32.mrf.mxu0
  %v177 = vadd.f32 0.0, %v176
  %v178 = vpop.f32.mrf.mxu0
  %179 = vmatprep.mubr.f32.mxu0 0.0
  %180 = vmatmul.mubr.f32.gmra.mxu0 %v27
  %v181 = vpop.f32.mrf.mxu0
  %v182 = vadd.f32 0.0, %v181
  %v183 = vpop.f32.mrf.mxu0
  %184 = vmatprep.mubr.f32.mxu0 0.0
  %185 = vmatmul.mubr.f32.gmra.mxu0 %v28
  %v186 = vpop.f32.mrf.mxu0
  %v187 = vadd.f32 0.0, %v186
  %v188 = vpop.f32.mrf.mxu0
  %189 = vdwg.mxu0
  %190 = vst [vmem:[%s2] sm:$0xff] %v112
  %191 = vst [vmem:[%s2 + $0x8] sm:$0xff] %v117
  %192 = vst [vmem:[%s2 + $0x10] sm:$0xff] %v122
  %193 = vst [vmem:[%s2 + $0x18] sm:$0xff] %v127
  %194 = vst [vmem:[%s2 + $0x20] sm:$0xff] %v132
  %195 = vst [vmem:[%s2 + $0x28] sm:$0xff] %v137
  %196 = vst [vmem:[%s2 + $0x30] sm:$0xff] %v142
  %197 = vst [vmem:[%s2 + $0x38] sm:$0xff] %v147
  %198 = vst [vmem:[%s2 + $0x40] sm:$0xff] %v152
  %199 = vst [vmem:[%s2 + $0x48] sm:$0xff] %v157
  %200 = vst [vmem:[%s2 + $0x50] sm:$0xff] %v162
  %201 = vst [vmem:[%s2 + $0x58] sm:$0xff] %v167
  %202 = vst [vmem:[%s2 + $0x60] sm:$0xff] %v172
  %203 = vst [vmem:[%s2 + $0x68] sm:$0xff] %v177
  %204 = vst [vmem:[%s2 + $0x70] sm:$0xff] %v182
  %205 = vst [vmem:[%s2 + $0x78] sm:$0xff] %v187
  %v206 = vadd.f32 %v112, %v117
  %v207 = vadd.f32 %v206, %v122
  %v208 = vadd.f32 %v207, %v127
  %v209 = vadd.f32 %v208, %v132
  %v210 = vadd.f32 %v209, %v137
  %v211 = vadd.f32 %v210, %v142
  %v212 = vadd.f32 %v211, %v147
  %v213 = vadd.f32 %v212, %v152
  %v214 = vadd.f32 %v213, %v157
  %v215 = vadd.f32 %v214, %v162
  %v216 = vadd.f32 %v215, %v167
  %v217 = vadd.f32 %v216, %v172
  %v218 = vadd.f32 %v217, %v177
  %v219 = vadd.f32 %v218, %v182
  %v220 = vadd.f32 %v219, %v187
  %v221 = vrot.slane %v220, 4
  %v222 = vadd.f32 %v220, %v221
  %v223 = vrot.slane %v222, 2
  %v224 = vadd.f32 %v222, %v223
  %v225 = vrot.slane %v224, 1
  %v226 = vadd.f32 %v224, %v225
  %v227 = vmul.f32 %v112, %v112
  %v228 = vmul.f32 %v117, %v117
  %v229 = vmul.f32 %v122, %v122
  %v230 = vmul.f32 %v127, %v127
  %v231 = vmul.f32 %v132, %v132
  %v232 = vmul.f32 %v137, %v137
  %v233 = vmul.f32 %v142, %v142
  %v234 = vmul.f32 %v147, %v147
  %v235 = vmul.f32 %v152, %v152
  %v236 = vmul.f32 %v157, %v157
  %v237 = vmul.f32 %v162, %v162
  %v238 = vmul.f32 %v167, %v167
  %v239 = vmul.f32 %v172, %v172
  %v240 = vmul.f32 %v177, %v177
  %v241 = vmul.f32 %v182, %v182
  %v242 = vmul.f32 %v187, %v187
  %v243 = vadd.f32 %v227, %v228
  %v244 = vadd.f32 %v243, %v229
  %v245 = vadd.f32 %v244, %v230
  %v246 = vadd.f32 %v245, %v231
  %v247 = vadd.f32 %v246, %v232
  %v248 = vadd.f32 %v247, %v233
  %v249 = vadd.f32 %v248, %v234
  %v250 = vadd.f32 %v249, %v235
  %v251 = vadd.f32 %v250, %v236
  %v252 = vadd.f32 %v251, %v237
  %v253 = vadd.f32 %v252, %v238
  %v254 = vadd.f32 %v253, %v239
  %v255 = vadd.f32 %v254, %v240
  %v256 = vadd.f32 %v255, %v241
  %v257 = vadd.f32 %v256, %v242
  %v258 = vrot.slane %v257, 4
  %v259 = vadd.f32 %v257, %v258
  %v260 = vrot.slane %v259, 2
  %v261 = vadd.f32 %v259, %v260
  %v262 = vrot.slane %v261, 1
  %v263 = vadd.f32 %v261, %v262
  %v264 = vlaneseq
  %v265 = vshrl.u32 %v264, 7
  %vm266 = vcmp.eq.s32.totalorder %v265, 0
  %vm267 = vcmp.eq.s32.totalorder %v265, 1
  %v268 = vsel %vm267, %v263, 0.0
  %v269 = vsel %vm266, %v226, %v268
  %270 = vst [vmem:[%s3] sm:$0xff] %v269
  // Predicated region
  $region10: #{block_forward_pallas.4} parent=0 // pred_check
    _
  $region11: #{block_forward_pallas.4} parent=0 // pred_check_branch
    %272 = sbr.rel (0) target = $region13
  $region12: #{block_forward_pallas.4} parent=0 // pred_region
    _
  $region13: #{block_forward_pallas.4} parent=0 // pred_fallthru
    _
  // Predicated region
  $region14: #{block_forward_pallas.4} parent=0 // pred_check
    _
  $region15: #{block_forward_pallas.4} parent=0 // pred_check_branch
    %274 = sbr.rel (0) target = $region17
  $region16: #{block_forward_pallas.4} parent=0 // pred_region
    _
  $region17: #{block_forward_pallas.4} parent=0 // pred_fallthru
    _
  // Predicated region
  $region18: #{block_forward_pallas.4} parent=0 // pred_check
    _
  $region19: #{block_forward_pallas.4} parent=0 // pred_check_branch
    %276 = sbr.rel (0) target = $region21
  $region20: #{block_forward_pallas.4} parent=0 // pred_region
    _
  $region21: #{block_forward_pallas.4} parent=0 // pred_fallthru
    _
  // Predicated region
  $region22: #{block_forward_pallas.4} parent=0 // pred_check
    _
  $region23: #{block_forward_pallas.4} parent=0 // pred_check_branch
    %278 = sbr.rel (0) target = $region25
  $region24: #{block_forward_pallas.4} parent=0 // pred_region
    _
  $region25: #{block_forward_pallas.4} parent=0 // pred_fallthru
    _

// kernel: block_forward_pallas.7
$region0: #{block_forward_pallas.7}
  #allocation0 [shape = 'u32[]', space=smem, size = 0x4, offset = 0x4, fixed_abs, tag = 'smem constant byte address 0x4 - core index']
  #allocation1 [shape = 'u32[144,128]{1,0:T(1,128)}', space=vmem, size = 0x12000, scoped, tag = 'internal scratch']
  %s0 = inlined_call_operand.vmem [shape: f32[128,128], index: 0, kind: input, shape index: {}]
  %s1 = inlined_call_operand.vmem [shape: f32[1,128], index: 1, kind: input, shape index: {}]
  %s2 = inlined_call_operand.vmem [shape: f32[1,128], index: 2, kind: input, shape index: {}]
  %s3 = inlined_call_operand.vmem [shape: f32[128,128], index: 3, kind: input, shape index: {}]
  %s4 = inlined_call_operand.hbm [shape: f32[128,128], index: 4, kind: output, shape index: {}]
  %s5 = sld [smem:[#allocation0]]
  $region26: #{block_forward_pallas.7} parent=0
    _
  %s7 = ssub.s32 1, %s5
  %s8 = scalar_select 0, %s7, %s5
  $region1: #{block_forward_pallas.7} parent=0
    #allocation2 [shape = 'u8[65536]{0}', space=vmem, size = 0x10000, scoped, tag = 'output window, operand 0, single buffered']
    #allocation3 [shape = 's32[1]{0}', space=sflag, size = 0x4, scoped, tag = 'scoped memory for block_forward_pallas.7']
    %9 = vsyncpa [#allocation3], 0
    // Predicated region
    $region2: #{block_forward_pallas.7} parent=1 // pred_check
      _
    $region3: #{block_forward_pallas.7} parent=1 // pred_check_branch
      %11 = sbr.rel (0) target = $region5
    $region4: #{block_forward_pallas.7} parent=1 // pred_region
      _
    $region5: #{block_forward_pallas.7} parent=1 // pred_fallthru
      _
    // Predicated region
    $region6: #{block_forward_pallas.7} parent=1 // pred_check
      _
    $region7: #{block_forward_pallas.7} parent=1 // pred_check_branch
      %13 = sbr.rel (0) target = $region9
    $region8: #{block_forward_pallas.7} parent=1 // pred_region
      _
    $region9: #{block_forward_pallas.7} parent=1 // pred_fallthru
      _
    // Predicated region
    $region10: #{block_forward_pallas.7} parent=1 // pred_check
      _
    $region11: #{block_forward_pallas.7} parent=1 // pred_check_branch
      %15 = sbr.rel (0) target = $region13
    $region12: #{block_forward_pallas.7} parent=1 // pred_region
      _
    $region13: #{block_forward_pallas.7} parent=1 // pred_fallthru
      _
    // Predicated region
    $region14: #{block_forward_pallas.7} parent=1 // pred_check
      _
    $region15: #{block_forward_pallas.7} parent=1 // pred_check_branch
      %17 = sbr.rel (0) target = $region17
    $region16: #{block_forward_pallas.7} parent=1 // pred_region
      _
    $region17: #{block_forward_pallas.7} parent=1 // pred_fallthru
      _
    %v18 = vld [vmem:[%s0] sm:$0xff]
    %v19 = vld [vmem:[%s0 + $0x8] sm:$0xff]
    %v20 = vld [vmem:[%s0 + $0x10] sm:$0xff]
    %v21 = vld [vmem:[%s0 + $0x18] sm:$0xff]
    %v22 = vld [vmem:[%s0 + $0x20] sm:$0xff]
    %v23 = vld [vmem:[%s0 + $0x28] sm:$0xff]
    %v24 = vld [vmem:[%s0 + $0x30] sm:$0xff]
    %v25 = vld [vmem:[%s0 + $0x38] sm:$0xff]
    %v26 = vld [vmem:[%s0 + $0x40] sm:$0xff]
    %v27 = vld [vmem:[%s0 + $0x48] sm:$0xff]
    %v28 = vld [vmem:[%s0 + $0x50] sm:$0xff]
    %v29 = vld [vmem:[%s0 + $0x58] sm:$0xff]
    %v30 = vld [vmem:[%s0 + $0x60] sm:$0xff]
    %v31 = vld [vmem:[%s0 + $0x68] sm:$0xff]
    %v32 = vld [vmem:[%s0 + $0x70] sm:$0xff]
    %v33 = vld [vmem:[%s0 + $0x78] sm:$0xff]
    %v34 = vld [vmem:[%s1] sm:$0x1]
    %v36 = vlaneseq
    %v37 = vshrl.u32 %v36, 7
    %v38 = vsub.s32 0, %v37
    %v39 = vrot.slane %v34, %v38
    %v41 = vmul.f32 %v18, %v39
    %v42 = vmul.f32 %v19, %v39
    %v43 = vmul.f32 %v20, %v39
    %v44 = vmul.f32 %v21, %v39
    %v45 = vmul.f32 %v22, %v39
    %v46 = vmul.f32 %v23, %v39
    %v47 = vmul.f32 %v24, %v39
    %v48 = vmul.f32 %v25, %v39
    %v49 = vmul.f32 %v26, %v39
    %v50 = vmul.f32 %v27, %v39
    %v51 = vmul.f32 %v28, %v39
    %v52 = vmul.f32 %v29, %v39
    %v53 = vmul.f32 %v30, %v39
    %v54 = vmul.f32 %v31, %v39
    %v55 = vmul.f32 %v32, %v39
    %v56 = vmul.f32 %v33, %v39
    %v57 = vld [vmem:[%s2] sm:$0x1]
    %v59 = vlaneseq
    %v60 = vshrl.u32 %v59, 7
    %v61 = vsub.s32 0, %v60
    %v62 = vrot.slane %v57, %v61
    %v64 = vadd.f32 %v41, %v62
    %v65 = vadd.f32 %v42, %v62
    %v66 = vadd.f32 %v43, %v62
    %v67 = vadd.f32 %v44, %v62
    %v68 = vadd.f32 %v45, %v62
    %v69 = vadd.f32 %v46, %v62
    %v70 = vadd.f32 %v47, %v62
    %v71 = vadd.f32 %v48, %v62
    %v72 = vadd.f32 %v49, %v62
    %v73 = vadd.f32 %v50, %v62
    %v74 = vadd.f32 %v51, %v62
    %v75 = vadd.f32 %v52, %v62
    %v76 = vadd.f32 %v53, %v62
    %v77 = vadd.f32 %v54, %v62
    %v78 = vadd.f32 %v55, %v62
    %v79 = vadd.f32 %v56, %v62
    %v80 = vld [vmem:[%s3] sm:$0xff]
    %v81 = vld [vmem:[%s3 + $0x8] sm:$0xff]
    %v82 = vld [vmem:[%s3 + $0x10] sm:$0xff]
    %v83 = vld [vmem:[%s3 + $0x18] sm:$0xff]
    %v84 = vld [vmem:[%s3 + $0x20] sm:$0xff]
    %v85 = vld [vmem:[%s3 + $0x28] sm:$0xff]
    %v86 = vld [vmem:[%s3 + $0x30] sm:$0xff]
    %v87 = vld [vmem:[%s3 + $0x38] sm:$0xff]
    %v88 = vld [vmem:[%s3 + $0x40] sm:$0xff]
    %v89 = vld [vmem:[%s3 + $0x48] sm:$0xff]
    %v90 = vld [vmem:[%s3 + $0x50] sm:$0xff]
    %v91 = vld [vmem:[%s3 + $0x58] sm:$0xff]
    %v92 = vld [vmem:[%s3 + $0x60] sm:$0xff]
    %v93 = vld [vmem:[%s3 + $0x68] sm:$0xff]
    %v94 = vld [vmem:[%s3 + $0x70] sm:$0xff]
    %v95 = vld [vmem:[%s3 + $0x78] sm:$0xff]
    %v96 = vadd.f32 %v64, %v80
    %v97 = vadd.f32 %v65, %v81
    %v98 = vadd.f32 %v66, %v82
    %v99 = vadd.f32 %v67, %v83
    %v100 = vadd.f32 %v68, %v84
    %v101 = vadd.f32 %v69, %v85
    %v102 = vadd.f32 %v70, %v86
    %v103 = vadd.f32 %v71, %v87
    %v104 = vadd.f32 %v72, %v88
    %v105 = vadd.f32 %v73, %v89
    %v106 = vadd.f32 %v74, %v90
    %v107 = vadd.f32 %v75, %v91
    %v108 = vadd.f32 %v76, %v92
    %v109 = vadd.f32 %v77, %v93
    %v110 = vadd.f32 %v78, %v94
    %v111 = vadd.f32 %v79, %v95
    %v112 = vmax.f32 %v96, 0.0
    %v113 = vmax.f32 %v97, 0.0
    %v114 = vmax.f32 %v98, 0.0
    %v115 = vmax.f32 %v99, 0.0
    %v116 = vmax.f32 %v100, 0.0
    %v117 = vmax.f32 %v101, 0.0
    %v118 = vmax.f32 %v102, 0.0
    %v119 = vmax.f32 %v103, 0.0
    %v120 = vmax.f32 %v104, 0.0
    %v121 = vmax.f32 %v105, 0.0
    %v122 = vmax.f32 %v106, 0.0
    %v123 = vmax.f32 %v107, 0.0
    %v124 = vmax.f32 %v108, 0.0
    %v125 = vmax.f32 %v109, 0.0
    %v126 = vmax.f32 %v110, 0.0
    %v127 = vmax.f32 %v111, 0.0
    %128 = vst [vmem:[#allocation2] sm:$0xff] %v112
    %129 = vst [vmem:[#allocation2 + $0x8] sm:$0xff] %v113
    %130 = vst [vmem:[#allocation2 + $0x10] sm:$0xff] %v114
    %131 = vst [vmem:[#allocation2 + $0x18] sm:$0xff] %v115
    %132 = vst [vmem:[#allocation2 + $0x20] sm:$0xff] %v116
    %133 = vst [vmem:[#allocation2 + $0x28] sm:$0xff] %v117
    %134 = vst [vmem:[#allocation2 + $0x30] sm:$0xff] %v118
    %135 = vst [vmem:[#allocation2 + $0x38] sm:$0xff] %v119
    %136 = vst [vmem:[#allocation2 + $0x40] sm:$0xff] %v120
    %137 = vst [vmem:[#allocation2 + $0x48] sm:$0xff] %v121
    %138 = vst [vmem:[#allocation2 + $0x50] sm:$0xff] %v122
    %139 = vst [vmem:[#allocation2 + $0x58] sm:$0xff] %v123
    %140 = vst [vmem:[#allocation2 + $0x60] sm:$0xff] %v124
    %141 = vst [vmem:[#allocation2 + $0x68] sm:$0xff] %v125
    %142 = vst [vmem:[#allocation2 + $0x70] sm:$0xff] %v126
    %143 = vst [vmem:[#allocation2 + $0x78] sm:$0xff] %v127
    // Predicated region
    $region18: #{block_forward_pallas.7} parent=1 // pred_check
      _
    $region19: #{block_forward_pallas.7} parent=1 // pred_check_branch
      %145 = sbr.rel (0) target = $region21
    $region20: #{block_forward_pallas.7} parent=1 // pred_region
      %s147 = ssub.s32 2048, 2048
      %148 = vsyncadd [#allocation3], %s147
      %s149 = sshll.u32 [#allocation2], 4
      %s150 = int_to_ptr.vmem [resolvable:$true] %s149
      %155 = dma.vmem_to_hbm [thread:$0]  %s150, 2048, %s4, [#allocation3], 128, 128, 8
    $region21: #{block_forward_pallas.7} parent=1 // pred_fallthru
      _
    // Predicated region
    $region22: #{block_forward_pallas.7} parent=1 // pred_check
      _
    $region23: #{block_forward_pallas.7} parent=1 // pred_check_branch
      %157 = sbr.rel (0) target = $region25
    $region24: #{block_forward_pallas.7} parent=1 // pred_region
      %158 = dma.done [#allocation3], 2048
    $region25: #{block_forward_pallas.7} parent=1 // pred_fallthru
      _
    %159 = vsyncpa [#allocation3], 1

// kernel: block_forward_pallas.6
$region0: #{block_forward_pallas.6}
  #allocation0 [shape = 'u32[]', space=smem, size = 0x4, offset = 0x4, fixed_abs, tag = 'smem constant byte address 0x4 - core index']
  #allocation1 [shape = 'u32[144,128]{1,0:T(1,128)}', space=vmem, size = 0x12000, scoped, tag = 'internal scratch']
  %s0 = inlined_call_operand.vmem [shape: f32[128,128], index: 0, kind: input, shape index: {}]
  %s1 = inlined_call_operand.vmem [shape: f32[1,128], index: 1, kind: input, shape index: {}]
  %s2 = inlined_call_operand.vmem [shape: f32[1,128], index: 2, kind: input, shape index: {}]
  %s3 = inlined_call_operand.vmem [shape: f32[128,128], index: 3, kind: input, shape index: {}]
  %s4 = inlined_call_operand.vmem [shape: f32[128,128], index: 4, kind: output, shape index: {0}]
  %s5 = inlined_call_operand.vmem [shape: f32[1,8,128], index: 5, kind: output, shape index: {1}]
  %6 = xla_tuple %s4, %s5
  %s7 = sld [smem:[#allocation0]]
  $region34: #{block_forward_pallas.6} parent=0
    _
  %s9 = ssub.s32 1, %s7
  %s10 = scalar_select 0, %s9, %s7
  // Predicated region
  $region2: #{block_forward_pallas.6} parent=0 // pred_check
    _
  $region3: #{block_forward_pallas.6} parent=0 // pred_check_branch
    %12 = sbr.rel (0) target = $region5
  $region4: #{block_forward_pallas.6} parent=0 // pred_region
    _
  $region5: #{block_forward_pallas.6} parent=0 // pred_fallthru
    _
  // Predicated region
  $region6: #{block_forward_pallas.6} parent=0 // pred_check
    _
  $region7: #{block_forward_pallas.6} parent=0 // pred_check_branch
    %14 = sbr.rel (0) target = $region9
  $region8: #{block_forward_pallas.6} parent=0 // pred_region
    _
  $region9: #{block_forward_pallas.6} parent=0 // pred_fallthru
    _
  // Predicated region
  $region10: #{block_forward_pallas.6} parent=0 // pred_check
    _
  $region11: #{block_forward_pallas.6} parent=0 // pred_check_branch
    %16 = sbr.rel (0) target = $region13
  $region12: #{block_forward_pallas.6} parent=0 // pred_region
    _
  $region13: #{block_forward_pallas.6} parent=0 // pred_fallthru
    _
  // Predicated region
  $region14: #{block_forward_pallas.6} parent=0 // pred_check
    _
  $region15: #{block_forward_pallas.6} parent=0 // pred_check_branch
    %18 = sbr.rel (0) target = $region17
  $region16: #{block_forward_pallas.6} parent=0 // pred_region
    _
  $region17: #{block_forward_pallas.6} parent=0 // pred_fallthru
    _
  %v19 = vld [vmem:[%s0] sm:$0xff]
  %v20 = vld [vmem:[%s0 + $0x8] sm:$0xff]
  %v21 = vld [vmem:[%s0 + $0x10] sm:$0xff]
  %v22 = vld [vmem:[%s0 + $0x18] sm:$0xff]
  %v23 = vld [vmem:[%s0 + $0x20] sm:$0xff]
  %v24 = vld [vmem:[%s0 + $0x28] sm:$0xff]
  %v25 = vld [vmem:[%s0 + $0x30] sm:$0xff]
  %v26 = vld [vmem:[%s0 + $0x38] sm:$0xff]
  %v27 = vld [vmem:[%s0 + $0x40] sm:$0xff]
  %v28 = vld [vmem:[%s0 + $0x48] sm:$0xff]
  %v29 = vld [vmem:[%s0 + $0x50] sm:$0xff]
  %v30 = vld [vmem:[%s0 + $0x58] sm:$0xff]
  %v31 = vld [vmem:[%s0 + $0x60] sm:$0xff]
  %v32 = vld [vmem:[%s0 + $0x68] sm:$0xff]
  %v33 = vld [vmem:[%s0 + $0x70] sm:$0xff]
  %v34 = vld [vmem:[%s0 + $0x78] sm:$0xff]
  %v35 = vld [vmem:[%s1] sm:$0x1]
  %v37 = vlaneseq
  %v38 = vshrl.u32 %v37, 7
  %v39 = vsub.s32 0, %v38
  %v40 = vrot.slane %v35, %v39
  %v42 = vmul.f32 %v19, %v40
  %v43 = vmul.f32 %v20, %v40
  %v44 = vmul.f32 %v21, %v40
  %v45 = vmul.f32 %v22, %v40
  %v46 = vmul.f32 %v23, %v40
  %v47 = vmul.f32 %v24, %v40
  %v48 = vmul.f32 %v25, %v40
  %v49 = vmul.f32 %v26, %v40
  %v50 = vmul.f32 %v27, %v40
  %v51 = vmul.f32 %v28, %v40
  %v52 = vmul.f32 %v29, %v40
  %v53 = vmul.f32 %v30, %v40
  %v54 = vmul.f32 %v31, %v40
  %v55 = vmul.f32 %v32, %v40
  %v56 = vmul.f32 %v33, %v40
  %v57 = vmul.f32 %v34, %v40
  %v58 = vld [vmem:[%s2] sm:$0x1]
  %v60 = vlaneseq
  %v61 = vshrl.u32 %v60, 7
  %v62 = vsub.s32 0, %v61
  %v63 = vrot.slane %v58, %v62
  %v65 = vadd.f32 %v42, %v63
  %v66 = vadd.f32 %v43, %v63
  %v67 = vadd.f32 %v44, %v63
  %v68 = vadd.f32 %v45, %v63
  %v69 = vadd.f32 %v46, %v63
  %v70 = vadd.f32 %v47, %v63
  %v71 = vadd.f32 %v48, %v63
  %v72 = vadd.f32 %v49, %v63
  %v73 = vadd.f32 %v50, %v63
  %v74 = vadd.f32 %v51, %v63
  %v75 = vadd.f32 %v52, %v63
  %v76 = vadd.f32 %v53, %v63
  %v77 = vadd.f32 %v54, %v63
  %v78 = vadd.f32 %v55, %v63
  %v79 = vadd.f32 %v56, %v63
  %v80 = vadd.f32 %v57, %v63
  %v81 = vmax.f32 %v65, 0.0
  %v82 = vmax.f32 %v66, 0.0
  %v83 = vmax.f32 %v67, 0.0
  %v84 = vmax.f32 %v68, 0.0
  %v85 = vmax.f32 %v69, 0.0
  %v86 = vmax.f32 %v70, 0.0
  %v87 = vmax.f32 %v71, 0.0
  %v88 = vmax.f32 %v72, 0.0
  %v89 = vmax.f32 %v73, 0.0
  %v90 = vmax.f32 %v74, 0.0
  %v91 = vmax.f32 %v75, 0.0
  %v92 = vmax.f32 %v76, 0.0
  %v93 = vmax.f32 %v77, 0.0
  %v94 = vmax.f32 %v78, 0.0
  %v95 = vmax.f32 %v79, 0.0
  %v96 = vmax.f32 %v80, 0.0
  %v97 = vld [vmem:[%s3] sm:$0xff]
  %v98 = vld [vmem:[%s3 + $0x8] sm:$0xff]
  %v99 = vld [vmem:[%s3 + $0x10] sm:$0xff]
  %v100 = vld [vmem:[%s3 + $0x18] sm:$0xff]
  %v101 = vld [vmem:[%s3 + $0x20] sm:$0xff]
  %v102 = vld [vmem:[%s3 + $0x28] sm:$0xff]
  %v103 = vld [vmem:[%s3 + $0x30] sm:$0xff]
  %v104 = vld [vmem:[%s3 + $0x38] sm:$0xff]
  %v105 = vld [vmem:[%s3 + $0x40] sm:$0xff]
  %v106 = vld [vmem:[%s3 + $0x48] sm:$0xff]
  %v107 = vld [vmem:[%s3 + $0x50] sm:$0xff]
  %v108 = vld [vmem:[%s3 + $0x58] sm:$0xff]
  %v109 = vld [vmem:[%s3 + $0x60] sm:$0xff]
  %v110 = vld [vmem:[%s3 + $0x68] sm:$0xff]
  %v111 = vld [vmem:[%s3 + $0x70] sm:$0xff]
  %v112 = vld [vmem:[%s3 + $0x78] sm:$0xff]
  %113 = vmatprep.subr.mxu0 0.0
  %114 = vmatpush1.msra.mxu0 %v112
  %115 = vmatprep.subr.mxu0 0.0
  %116 = vmatpush1.msra.mxu0 %v111
  %117 = vmatprep.subr.mxu0 0.0
  %118 = vmatpush1.msra.mxu0 %v110
  %119 = vmatprep.subr.mxu0 0.0
  %120 = vmatpush1.msra.mxu0 %v109
  %121 = vmatprep.subr.mxu0 0.0
  %122 = vmatpush1.msra.mxu0 %v108
  %123 = vmatprep.subr.mxu0 0.0
  %124 = vmatpush1.msra.mxu0 %v107
  %125 = vmatprep.subr.mxu0 0.0
  %126 = vmatpush1.msra.mxu0 %v106
  %127 = vmatprep.subr.mxu0 0.0
  %128 = vmatpush1.msra.mxu0 %v105
  %129 = vmatprep.subr.mxu0 0.0
  %130 = vmatpush1.msra.mxu0 %v104
  %131 = vmatprep.subr.mxu0 0.0
  %132 = vmatpush1.msra.mxu0 %v103
  %133 = vmatprep.subr.mxu0 0.0
  %134 = vmatpush1.msra.mxu0 %v102
  %135 = vmatprep.subr.mxu0 0.0
  %136 = vmatpush1.msra.mxu0 %v101
  %137 = vmatprep.subr.mxu0 0.0
  %138 = vmatpush1.msra.mxu0 %v100
  %139 = vmatprep.subr.mxu0 0.0
  %140 = vmatpush1.msra.mxu0 %v99
  %141 = vmatprep.subr.mxu0 0.0
  %142 = vmatpush1.msra.mxu0 %v98
  %143 = vmatprep.subr.mxu0 0.0
  %144 = vmatpush1.msra.mxu0 %v97
  %145 = vmatprep.subr.mxu0 0.0
  %146 = vmatpush2.msra.mxu0 0.0
  %147 = vmatprep.subr.mxu0 0.0
  %148 = vmatpush2.msra.mxu0 0.0
  %149 = vmatprep.subr.mxu0 0.0
  %150 = vmatpush2.msra.mxu0 0.0
  %151 = vmatprep.subr.mxu0 0.0
  %152 = vmatpush2.msra.mxu0 0.0
  %153 = vmatprep.subr.mxu0 0.0
  %154 = vmatpush2.msra.mxu0 0.0
  %155 = vmatprep.subr.mxu0 0.0
  %156 = vmatpush2.msra.mxu0 0.0
  %157 = vmatprep.subr.mxu0 0.0
  %158 = vmatpush2.msra.mxu0 0.0
  %159 = vmatprep.subr.mxu0 0.0
  %160 = vmatpush2.msra.mxu0 0.0
  %161 = vmatprep.subr.mxu0 0.0
  %162 = vmatpush2.msra.mxu0 0.0
  %163 = vmatprep.subr.mxu0 0.0
  %164 = vmatpush2.msra.mxu0 0.0
  %165 = vmatprep.subr.mxu0 0.0
  %166 = vmatpush2.msra.mxu0 0.0
  %167 = vmatprep.subr.mxu0 0.0
  %168 = vmatpush2.msra.mxu0 0.0
  %169 = vmatprep.subr.mxu0 0.0
  %170 = vmatpush2.msra.mxu0 0.0
  %171 = vmatprep.subr.mxu0 0.0
  %172 = vmatpush2.msra.mxu0 0.0
  %173 = vmatprep.subr.mxu0 0.0
  %174 = vmatpush2.msra.mxu0 0.0
  %175 = vmatprep.subr.mxu0 0.0
  %176 = vmatpush2.msra.mxu0 0.0
  %177 = vmatprep.mubr.f32.mxu0 0.0
  %178 = vmatmul.mubr.f32.gmra.mxu0 %v81
  %v179 = vpop.f32.mrf.mxu0
  %v180 = vadd.f32 0.0, %v179
  %v181 = vpop.f32.mrf.mxu0
  %182 = vmatprep.mubr.f32.mxu0 0.0
  %183 = vmatmul.mubr.f32.gmra.mxu0 %v82
  %v184 = vpop.f32.mrf.mxu0
  %v185 = vadd.f32 0.0, %v184
  %v186 = vpop.f32.mrf.mxu0
  %187 = vmatprep.mubr.f32.mxu0 0.0
  %188 = vmatmul.mubr.f32.gmra.mxu0 %v83
  %v189 = vpop.f32.mrf.mxu0
  %v190 = vadd.f32 0.0, %v189
  %v191 = vpop.f32.mrf.mxu0
  %192 = vmatprep.mubr.f32.mxu0 0.0
  %193 = vmatmul.mubr.f32.gmra.mxu0 %v84
  %v194 = vpop.f32.mrf.mxu0
  %v195 = vadd.f32 0.0, %v194
  %v196 = vpop.f32.mrf.mxu0
  %197 = vmatprep.mubr.f32.mxu0 0.0
  %198 = vmatmul.mubr.f32.gmra.mxu0 %v85
  %v199 = vpop.f32.mrf.mxu0
  %v200 = vadd.f32 0.0, %v199
  %v201 = vpop.f32.mrf.mxu0
  %202 = vmatprep.mubr.f32.mxu0 0.0
  %203 = vmatmul.mubr.f32.gmra.mxu0 %v86
  %v204 = vpop.f32.mrf.mxu0
  %v205 = vadd.f32 0.0, %v204
  %v206 = vpop.f32.mrf.mxu0
  %207 = vmatprep.mubr.f32.mxu0 0.0
  %208 = vmatmul.mubr.f32.gmra.mxu0 %v87
  %v209 = vpop.f32.mrf.mxu0
  %v210 = vadd.f32 0.0, %v209
  %v211 = vpop.f32.mrf.mxu0
  %212 = vmatprep.mubr.f32.mxu0 0.0
  %213 = vmatmul.mubr.f32.gmra.mxu0 %v88
  %v214 = vpop.f32.mrf.mxu0
  %v215 = vadd.f32 0.0, %v214
  %v216 = vpop.f32.mrf.mxu0
  %217 = vmatprep.mubr.f32.mxu0 0.0
  %218 = vmatmul.mubr.f32.gmra.mxu0 %v89
  %v219 = vpop.f32.mrf.mxu0
  %v220 = vadd.f32 0.0, %v219
  %v221 = vpop.f32.mrf.mxu0
  %222 = vmatprep.mubr.f32.mxu0 0.0
  %223 = vmatmul.mubr.f32.gmra.mxu0 %v90
  %v224 = vpop.f32.mrf.mxu0
  %v225 = vadd.f32 0.0, %v224
  %v226 = vpop.f32.mrf.mxu0
  %227 = vmatprep.mubr.f32.mxu0 0.0
  %228 = vmatmul.mubr.f32.gmra.mxu0 %v91
  %v229 = vpop.f32.mrf.mxu0
  %v230 = vadd.f32 0.0, %v229
  %v231 = vpop.f32.mrf.mxu0
  %232 = vmatprep.mubr.f32.mxu0 0.0
  %233 = vmatmul.mubr.f32.gmra.mxu0 %v92
  %v234 = vpop.f32.mrf.mxu0
  %v235 = vadd.f32 0.0, %v234
  %v236 = vpop.f32.mrf.mxu0
  %237 = vmatprep.mubr.f32.mxu0 0.0
  %238 = vmatmul.mubr.f32.gmra.mxu0 %v93
  %v239 = vpop.f32.mrf.mxu0
  %v240 = vadd.f32 0.0, %v239
  %v241 = vpop.f32.mrf.mxu0
  %242 = vmatprep.mubr.f32.mxu0 0.0
  %243 = vmatmul.mubr.f32.gmra.mxu0 %v94
  %v244 = vpop.f32.mrf.mxu0
  %v245 = vadd.f32 0.0, %v244
  %v246 = vpop.f32.mrf.mxu0
  %247 = vmatprep.mubr.f32.mxu0 0.0
  %248 = vmatmul.mubr.f32.gmra.mxu0 %v95
  %v249 = vpop.f32.mrf.mxu0
  %v250 = vadd.f32 0.0, %v249
  %v251 = vpop.f32.mrf.mxu0
  %252 = vmatprep.mubr.f32.mxu0 0.0
  %253 = vmatmul.mubr.f32.gmra.mxu0 %v96
  %v254 = vpop.f32.mrf.mxu0
  %v255 = vadd.f32 0.0, %v254
  %v256 = vpop.f32.mrf.mxu0
  %257 = vdwg.mxu0
  %258 = vst [vmem:[%s4] sm:$0xff] %v180
  %259 = vst [vmem:[%s4 + $0x8] sm:$0xff] %v185
  %260 = vst [vmem:[%s4 + $0x10] sm:$0xff] %v190
  %261 = vst [vmem:[%s4 + $0x18] sm:$0xff] %v195
  %262 = vst [vmem:[%s4 + $0x20] sm:$0xff] %v200
  %263 = vst [vmem:[%s4 + $0x28] sm:$0xff] %v205
  %264 = vst [vmem:[%s4 + $0x30] sm:$0xff] %v210
  %265 = vst [vmem:[%s4 + $0x38] sm:$0xff] %v215
  %266 = vst [vmem:[%s4 + $0x40] sm:$0xff] %v220
  %267 = vst [vmem:[%s4 + $0x48] sm:$0xff] %v225
  %268 = vst [vmem:[%s4 + $0x50] sm:$0xff] %v230
  %269 = vst [vmem:[%s4 + $0x58] sm:$0xff] %v235
  %270 = vst [vmem:[%s4 + $0x60] sm:$0xff] %v240
  %271 = vst [vmem:[%s4 + $0x68] sm:$0xff] %v245
  %272 = vst [vmem:[%s4 + $0x70] sm:$0xff] %v250
  %273 = vst [vmem:[%s4 + $0x78] sm:$0xff] %v255
  %v274 = vadd.f32 %v180, %v185
  %v275 = vadd.f32 %v274, %v190
  %v276 = vadd.f32 %v275, %v195
  %v277 = vadd.f32 %v276, %v200
  %v278 = vadd.f32 %v277, %v205
  %v279 = vadd.f32 %v278, %v210
  %v280 = vadd.f32 %v279, %v215
  %v281 = vadd.f32 %v280, %v220
  %v282 = vadd.f32 %v281, %v225
  %v283 = vadd.f32 %v282, %v230
  %v284 = vadd.f32 %v283, %v235
  %v285 = vadd.f32 %v284, %v240
  %v286 = vadd.f32 %v285, %v245
  %v287 = vadd.f32 %v286, %v250
  %v288 = vadd.f32 %v287, %v255
  %v289 = vrot.slane %v288, 4
  %v290 = vadd.f32 %v288, %v289
  %v291 = vrot.slane %v290, 2
  %v292 = vadd.f32 %v290, %v291
  %v293 = vrot.slane %v292, 1
  %v294 = vadd.f32 %v292, %v293
  %v295 = vmul.f32 %v180, %v180
  %v296 = vmul.f32 %v185, %v185
  %v297 = vmul.f32 %v190, %v190
  %v298 = vmul.f32 %v195, %v195
  %v299 = vmul.f32 %v200, %v200
  %v300 = vmul.f32 %v205, %v205
  %v301 = vmul.f32 %v210, %v210
  %v302 = vmul.f32 %v215, %v215
  %v303 = vmul.f32 %v220, %v220
  %v304 = vmul.f32 %v225, %v225
  %v305 = vmul.f32 %v230, %v230
  %v306 = vmul.f32 %v235, %v235
  %v307 = vmul.f32 %v240, %v240
  %v308 = vmul.f32 %v245, %v245
  %v309 = vmul.f32 %v250, %v250
  %v310 = vmul.f32 %v255, %v255
  %v311 = vadd.f32 %v295, %v296
  %v312 = vadd.f32 %v311, %v297
  %v313 = vadd.f32 %v312, %v298
  %v314 = vadd.f32 %v313, %v299
  %v315 = vadd.f32 %v314, %v300
  %v316 = vadd.f32 %v315, %v301
  %v317 = vadd.f32 %v316, %v302
  %v318 = vadd.f32 %v317, %v303
  %v319 = vadd.f32 %v318, %v304
  %v320 = vadd.f32 %v319, %v305
  %v321 = vadd.f32 %v320, %v306
  %v322 = vadd.f32 %v321, %v307
  %v323 = vadd.f32 %v322, %v308
  %v324 = vadd.f32 %v323, %v309
  %v325 = vadd.f32 %v324, %v310
  %v326 = vrot.slane %v325, 4
  %v327 = vadd.f32 %v325, %v326
  %v328 = vrot.slane %v327, 2
  %v329 = vadd.f32 %v327, %v328
  %v330 = vrot.slane %v329, 1
  %v331 = vadd.f32 %v329, %v330
  %v332 = vlaneseq
  %v333 = vshrl.u32 %v332, 7
  %vm334 = vcmp.eq.s32.totalorder %v333, 0
  %vm335 = vcmp.eq.s32.totalorder %v333, 1
  %v336 = vsel %vm335, %v331, 0.0
  %v337 = vsel %vm334, %v294, %v336
  %338 = vst [vmem:[%s5] sm:$0xff] %v337
  // Predicated region
  $region18: #{block_forward_pallas.6} parent=0 // pred_check
    _
  $region19: #{block_forward_pallas.6} parent=0 // pred_check_branch
    %340 = sbr.rel (0) target = $region21
  $region20: #{block_forward_pallas.6} parent=0 // pred_region
    _
  $region21: #{block_forward_pallas.6} parent=0 // pred_fallthru
    _
  // Predicated region
  $region22: #{block_forward_pallas.6} parent=0 // pred_check
    _
  $region23: #{block_forward_pallas.6} parent=0 // pred_check_branch
    %342 = sbr.rel (0) target = $region25
  $region24: #{block_forward_pallas.6} parent=0 // pred_region
    _
  $region25: #{block_forward_pallas.6} parent=0 // pred_fallthru
    _
  // Predicated region
  $region26: #{block_forward_pallas.6} parent=0 // pred_check
    _
  $region27: #{block_forward_pallas.6} parent=0 // pred_check_branch
    %344 = sbr.rel (0) target = $region29
  $region28: #{block_forward_pallas.6} parent=0 // pred_region
    _
  $region29: #{block_forward_pallas.6} parent=0 // pred_fallthru
    _
  // Predicated region
  $region30: #{block_forward_pallas.6} parent=0 // pred_check
    _
  $region31: #{block_forward_pallas.6} parent=0 // pred_check_branch
    %346 = sbr.rel (0) target = $region33
  $region32: #{block_forward_pallas.6} parent=0 // pred_region
    _
  $region33: #{block_forward_pallas.6} parent=0 // pred_fallthru
    _

// kernel: block_forward_pallas.5
$region0: #{block_forward_pallas.5}
  #allocation0 [shape = 'u32[]', space=smem, size = 0x4, offset = 0x4, fixed_abs, tag = 'smem constant byte address 0x4 - core index']
  #allocation1 [shape = 'u32[144,128]{1,0:T(1,128)}', space=vmem, size = 0x12000, scoped, tag = 'internal scratch']
  #allocation2 [shape = 'f32[10,10,128]{2,1,0:T(8,128)}', space=vmem, size = 0x14000, scoped, tag = 'scratch operand']
  #allocation3 [shape = 'f32[10,8,384]{2,1,0:T(8,128)}', space=vmem, size = 0x1e000, scoped, tag = 'scratch operand']
  %s0 = inlined_call_operand.vmem [shape: f32[2,8,8,128], index: 0, kind: input, shape index: {}]
  %s1 = inlined_call_operand.vmem [shape: f32[1,128], index: 1, kind: input, shape index: {}]
  %s2 = inlined_call_operand.vmem [shape: f32[1,128], index: 2, kind: input, shape index: {}]
  %s3 = inlined_call_operand.vmem [shape: f32[3,384,128], index: 3, kind: input, shape index: {}]
  %s4 = inlined_call_operand.vmem [shape: f32[2,64,128], index: 4, kind: output, shape index: {0}]
  %s5 = inlined_call_operand.vmem [shape: f32[2,8,128], index: 5, kind: output, shape index: {1}]
  %6 = xla_tuple %s4, %s5
  %s7 = sld [smem:[#allocation0]]
  $region57: #{block_forward_pallas.5} parent=0
    _
  %s9 = ssub.s32 1, %s7
  %s10 = scalar_select 0, %s9, %s7
  loop: start=0, step=1, limit=4
  $region2: #{block_forward_pallas.5} parent=0 // loop_pre_header
    _
  $region3: #{block_forward_pallas.5} parent=0 // loop_header
    %s12 = sphi 0, %s16
    %p13 = scmp.ge.s32.totalorder %s12, 4
    %s22 = sphi 0, %s24
    %s25 = sphi 0, %s22
    %s26 = sphi 0, %s25
    %s42 = sphi 0, %s26
    %s46 = sphi 0, %s46
    %s48 = sphi 0, %s46
    %s49 = sphi 0, %s48
    %s63 = sphi 0, %s49
    %s67 = sphi 0, %s67
    %s69 = sphi 0, %s67
    %s70 = sphi 0, %s69
    %s84 = sphi 0, %s70
    %s88 = sphi 0, %s88
    %s90 = sphi 0, %s88
    %s91 = sphi 0, %s90
    %s105 = sphi 0, %s91
    %s111 = sphi 0, %s113
    %s114 = sphi 0, %s111
    %s115 = sphi 0, %s114
    %s131 = sphi 0, %s115
    %s137 = sphi 0, %s139
    %s140 = sphi 0, %s137
    %s141 = sphi 0, %s140
    %s157 = sphi 0, %s141
  $region4: #{block_forward_pallas.5} parent=0 // loop_header_branch
    %15 = sbr.rel (%p13) target = $region8
  $region5: #{block_forward_pallas.5} parent=0 // loop_body
    %s17 = ssub.s32 %s12, 1
    %s18 = ssub.s32 %s12, 2
    %s19 = sadd.s32 %s12, 1
    %s20 = ssub.s32 %s12, %s19
    %p21 = scmp.eq.s32.totalorder %s20, 0
    %s23 = sadd.s32 %s22, 1
    %s24 = scalar_select %p21, %s22, %s23
    %p27 = pneg %p21
    %p28 = scmp.eq.s32.totalorder %s12, 1
    %p29 = por %p27, %p28
    %p30 = scmp.ne.s32.totalorder %s22, %s25
    %p31 = scmp.eq.s32.totalorder %s12, 0
    %p32 = por %p30, %p31
    %p33 = scmp.ne.s32.totalorder %s22, %s25
    %p34 = scmp.eq.s32.totalorder %s17, 1
    %p35 = por %p33, %p34
    %p36 = scmp.ne.s32.totalorder %s25, %s26
    %p37 = scmp.eq.s32.totalorder %s17, 0
    %p38 = por %p36, %p37
    %p39 = scmp.ne.s32.totalorder %s25, %s26
    %p40 = scmp.eq.s32.totalorder %s18, 1
    %p41 = por %p39, %p40
    %p43 = scmp.ne.s32.totalorder %s26, %s42
    %p44 = scmp.eq.s32.totalorder %s18, 0
    %p45 = por %p43, %p44
    %s47 = sadd.s32 %s46, 1
    %p50 = scmp.eq.s32.totalorder %s12, 1
    %p51 = scmp.ne.s32.totalorder %s46, %s48
    %p52 = scmp.eq.s32.totalorder %s12, 0
    %p53 = por %p51, %p52
    %p54 = scmp.ne.s32.totalorder %s46, %s48
    %p55 = scmp.eq.s32.totalorder %s17, 1
    %p56 = por %p54, %p55
    %p57 = scmp.ne.s32.totalorder %s48, %s49
    %p58 = scmp.eq.s32.totalorder %s17, 0
    %p59 = por %p57, %p58
    %p60 = scmp.ne.s32.totalorder %s48, %s49
    %p61 = scmp.eq.s32.totalorder %s18, 1
    %p62 = por %p60, %p61
    %p64 = scmp.ne.s32.totalorder %s49, %s63
    %p65 = scmp.eq.s32.totalorder %s18, 0
    %p66 = por %p64, %p65
    %s68 = sadd.s32 %s67, 1
    %p71 = scmp.eq.s32.totalorder %s12, 1
    %p72 = scmp.ne.s32.totalorder %s67, %s69
    %p73 = scmp.eq.s32.totalorder %s12, 0
    %p74 = por %p72, %p73
    %p75 = scmp.ne.s32.totalorder %s67, %s69
    %p76 = scmp.eq.s32.totalorder %s17, 1
    %p77 = por %p75, %p76
    %p78 = scmp.ne.s32.totalorder %s69, %s70
    %p79 = scmp.eq.s32.totalorder %s17, 0
    %p80 = por %p78, %p79
    %p81 = scmp.ne.s32.totalorder %s69, %s70
    %p82 = scmp.eq.s32.totalorder %s18, 1
    %p83 = por %p81, %p82
    %p85 = scmp.ne.s32.totalorder %s70, %s84
    %p86 = scmp.eq.s32.totalorder %s18, 0
    %p87 = por %p85, %p86
    %s89 = sadd.s32 %s88, 1
    %p92 = scmp.eq.s32.totalorder %s12, 1
    %p93 = scmp.ne.s32.totalorder %s88, %s90
    %p94 = scmp.eq.s32.totalorder %s12, 0
    %p95 = por %p93, %p94
    %p96 = scmp.ne.s32.totalorder %s88, %s90
    %p97 = scmp.eq.s32.totalorder %s17, 1
    %p98 = por %p96, %p97
    %p99 = scmp.ne.s32.totalorder %s90, %s91
    %p100 = scmp.eq.s32.totalorder %s17, 0
    %p101 = por %p99, %p100
    %p102 = scmp.ne.s32.totalorder %s90, %s91
    %p103 = scmp.eq.s32.totalorder %s18, 1
    %p104 = por %p102, %p103
    %p106 = scmp.ne.s32.totalorder %s91, %s105
    %p107 = scmp.eq.s32.totalorder %s18, 0
    %p108 = por %p106, %p107
    %s109 = ssub.s32 %s12, %s19
    %p110 = scmp.eq.s32.totalorder %s109, 0
    %s112 = sadd.s32 %s111, 1
    %s113 = scalar_select %p110, %s111, %s112
    %p116 = pneg %p110
    %p117 = scmp.eq.s32.totalorder %s12, 1
    %p118 = por %p116, %p117
    %p119 = scmp.ne.s32.totalorder %s111, %s114
    %p120 = scmp.eq.s32.totalorder %s12, 0
    %p121 = por %p119, %p120
    %p122 = scmp.ne.s32.totalorder %s111, %s114
    %p123 = scmp.eq.s32.totalorder %s17, 1
    %p124 = por %p122, %p123
    %p125 = scmp.ne.s32.totalorder %s114, %s115
    %p126 = scmp.eq.s32.totalorder %s17, 0
    %p127 = por %p125, %p126
    %p128 = scmp.ne.s32.totalorder %s114, %s115
    %p129 = scmp.eq.s32.totalorder %s18, 1
    %p130 = por %p128, %p129
    %p132 = scmp.ne.s32.totalorder %s115, %s131
    %p133 = scmp.eq.s32.totalorder %s18, 0
    %p134 = por %p132, %p133
    %s135 = ssub.s32 %s12, %s19
    %p136 = scmp.eq.s32.totalorder %s135, 0
    %s138 = sadd.s32 %s137, 1
    %s139 = scalar_select %p136, %s137, %s138
    %p142 = pneg %p136
    %p143 = scmp.eq.s32.totalorder %s12, 1
    %p144 = por %p142, %p143
    %p145 = scmp.ne.s32.totalorder %s137, %s140
    %p146 = scmp.eq.s32.totalorder %s12, 0
    %p147 = por %p145, %p146
    %p148 = scmp.ne.s32.totalorder %s137, %s140
    %p149 = scmp.eq.s32.totalorder %s17, 1
    %p150 = por %p148, %p149
    %p151 = scmp.ne.s32.totalorder %s140, %s141
    %p152 = scmp.eq.s32.totalorder %s17, 0
    %p153 = por %p151, %p152
    %p154 = scmp.ne.s32.totalorder %s140, %s141
    %p155 = scmp.eq.s32.totalorder %s18, 1
    %p156 = por %p154, %p155
    %p158 = scmp.ne.s32.totalorder %s141, %s157
    %p159 = scmp.eq.s32.totalorder %s18, 0
    %p160 = por %p158, %p159
    %p161 = scmp.le.s32.totalorder 1, %s12
    %p162 = scmp.lt.s32.totalorder %s12, 3
    %p163 = pnand %p161, %p162
    %p164 = pneg %p163
    // Predicated region
    $region9: #{block_forward_pallas.5} parent=5 // pred_check
      _
    $region10: #{block_forward_pallas.5} parent=5 // pred_check_branch
      %166 = sbr.rel (%p163) target = $region12
    $region11: #{block_forward_pallas.5} parent=5 // pred_region
      %s167 = ssub.s32 %s12, 1
      // Predicated region
      $region13: #{block_forward_pallas.5} parent=11 // pred_check
        %p168 = pneg %p59
      $region14: #{block_forward_pallas.5} parent=11 // pred_check_branch
        %170 = sbr.rel (%p168) target = $region16
      $region15: #{block_forward_pallas.5} parent=11 // pred_region
        _
      $region16: #{block_forward_pallas.5} parent=11 // pred_fallthru
        _
      // Predicated region
      $region17: #{block_forward_pallas.5} parent=11 // pred_check
        %p171 = pneg %p80
      $region18: #{block_forward_pallas.5} parent=11 // pred_check_branch
        %173 = sbr.rel (%p171) target = $region20
      $region19: #{block_forward_pallas.5} parent=11 // pred_region
        _
      $region20: #{block_forward_pallas.5} parent=11 // pred_fallthru
        _
      // Predicated region
      $region21: #{block_forward_pallas.5} parent=11 // pred_check
        %p174 = pneg %p101
      $region22: #{block_forward_pallas.5} parent=11 // pred_check_branch
        %176 = sbr.rel (%p174) target = $region24
      $region23: #{block_forward_pallas.5} parent=11 // pred_region
        _
      $region24: #{block_forward_pallas.5} parent=11 // pred_fallthru
        _
    $region12: #{block_forward_pallas.5} parent=5 // pred_fallthru
      _
    %p177 = scmp.lt.s32.totalorder %s12, 2
    // Predicated region
    $region25: #{block_forward_pallas.5} parent=5 // pred_check
      %p178 = pneg %p177
    $region26: #{block_forward_pallas.5} parent=5 // pred_check_branch
      %180 = sbr.rel (%p178) target = $region28
    $region27: #{block_forward_pallas.5} parent=5 // pred_region
      // Predicated region
      $region29: #{block_forward_pallas.5} parent=27 // pred_check
        %p181 = pneg %p32
      $region30: #{block_forward_pallas.5} parent=27 // pred_check_branch
        %183 = sbr.rel (%p181) target = $region32
      $region31: #{block_forward_pallas.5} parent=27 // pred_region
        %p184 = scmp.lt.s32.totalorder %s12, 1
        %s185 = scalar_select %p184, %s12, 1
        %s186 = smul.addr %s185, 8
        %s187 = smul.addr %s186, 8
        %s188 = scalar_lea.vmem %s0, %s187
      $region32: #{block_forward_pallas.5} parent=27 // pred_fallthru
        _
    $region28: #{block_forward_pallas.5} parent=5 // pred_fallthru
      _
    %p189 = scmp.le.s32.totalorder 1, %s12
    %p190 = scmp.lt.s32.totalorder %s12, 3
    %p191 = pnand %p189, %p190
    %p192 = pneg %p191
    // Predicated region
    $region33: #{block_forward_pallas.5} parent=5 // pred_check
      _
    $region34: #{block_forward_pallas.5} parent=5 // pred_check_branch
      %194 = sbr.rel (%p191) target = $region36
    $region35: #{block_forward_pallas.5} parent=5 // pred_region
      %s195 = ssub.s32 %s12, 1
      %p196 = scmp.lt.s32.totalorder %s17, 1
      %s197 = scalar_select %p196, %s17, 1
      %s198 = smul.addr %s197, 8
      %s199 = smul.addr %s198, 8
      %s200 = scalar_lea.vmem %s0, %s199
      %p201 = pneg %p38
      %p202 = pneg %p35
      %p203 = pneg %p59
      %p204 = pneg %p56
      %p205 = pneg %p80
      %p206 = pneg %p77
      %p207 = pneg %p101
      %p208 = pneg %p98
      %p209 = pneg %p127
      %p210 = pneg %p124
      %p211 = scmp.lt.s32.totalorder %s17, 1
      %s212 = scalar_select %p211, %s17, 1
      %s213 = smul.addr %s212, 8
      %s214 = smul.addr %s213, 8
      %s215 = scalar_lea.vmem %s4, %s214
      %p216 = pneg %p153
      %p217 = pneg %p150
      %p218 = scmp.lt.s32.totalorder %s17, 1
      %s219 = scalar_select %p218, %s17, 1
      %s220 = smul.addr %s219, 8
      %s221 = scalar_lea.vmem %s5, %s220
      %p222 = scmp.lt.s32.totalorder %s17, 1
      %s223 = scalar_select %p222, %s17, 1
      %s224 = smul.addr %s223, 8
      %s225 = smul.addr %s224, 8
      %s226 = scalar_lea.vmem %s0, %s225
      %p227 = scmp.lt.s32.totalorder %s17, 1
      %s228 = scalar_select %p227, %s17, 1
      %s229 = smul.addr %s228, 8
      %s230 = smul.addr %s229, 8
      %s231 = scalar_lea.vmem %s4, %s230
      %p232 = scmp.lt.s32.totalorder %s17, 1
      %s233 = scalar_select %p232, %s17, 1
      %s234 = smul.addr %s233, 8
      %s235 = scalar_lea.vmem %s5, %s234
      %236 = vst [vmem:[#allocation2] sm:$0xff] 0.0
      %237 = vst [vmem:[#allocation2 + $0x8] sm:$0x3] 0.0
      %238 = vst [vmem:[#allocation2 + $0x10] sm:$0xff] 0.0
      %239 = vst [vmem:[#allocation2 + $0x18] sm:$0x3] 0.0
      %240 = vst [vmem:[#allocation2 + $0x20] sm:$0xff] 0.0
      %241 = vst [vmem:[#allocation2 + $0x28] sm:$0x3] 0.0
      %242 = vst [vmem:[#allocation2 + $0x30] sm:$0xff] 0.0
      %243 = vst [vmem:[#allocation2 + $0x38] sm:$0x3] 0.0
      %244 = vst [vmem:[#allocation2 + $0x40] sm:$0xff] 0.0
      %245 = vst [vmem:[#allocation2 + $0x48] sm:$0x3] 0.0
      %246 = vst [vmem:[#allocation2 + $0x50] sm:$0xff] 0.0
      %247 = vst [vmem:[#allocation2 + $0x58] sm:$0x3] 0.0
      %248 = vst [vmem:[#allocation2 + $0x60] sm:$0xff] 0.0
      %249 = vst [vmem:[#allocation2 + $0x68] sm:$0x3] 0.0
      %250 = vst [vmem:[#allocation2 + $0x70] sm:$0xff] 0.0
      %251 = vst [vmem:[#allocation2 + $0x78] sm:$0x3] 0.0
      %252 = vst [vmem:[#allocation2 + $0x80] sm:$0xff] 0.0
      %253 = vst [vmem:[#allocation2 + $0x88] sm:$0x3] 0.0
      %254 = vst [vmem:[#allocation2 + $0x90] sm:$0xff] 0.0
      %255 = vst [vmem:[#allocation2 + $0x98] sm:$0x3] 0.0
      %v256 = vld [vmem:[%s226] sm:$0xff]
      %v257 = vld [vmem:[%s226 + $0x8] sm:$0xff]
      %v258 = vld [vmem:[%s226 + $0x10] sm:$0xff]
      %v259 = vld [vmem:[%s226 + $0x18] sm:$0xff]
      %v260 = vld [vmem:[%s226 + $0x20] sm:$0xff]
      %v261 = vld [vmem:[%s226 + $0x28] sm:$0xff]
      %v262 = vld [vmem:[%s226 + $0x30] sm:$0xff]
      %v263 = vld [vmem:[%s226 + $0x38] sm:$0xff]
      %v264 = vld [vmem:[%s1] sm:$0x1]
      %v266 = vlaneseq
      %v267 = vshrl.u32 %v266, 7
      %v268 = vsub.s32 0, %v267
      %v269 = vrot.slane %v264, %v268
      %v271 = vmul.f32 %v256, %v269
      %v272 = vmul.f32 %v257, %v269
      %v273 = vmul.f32 %v258, %v269
      %v274 = vmul.f32 %v259, %v269
      %v275 = vmul.f32 %v260, %v269
      %v276 = vmul.f32 %v261, %v269
      %v277 = vmul.f32 %v262, %v269
      %v278 = vmul.f32 %v263, %v269
      %v279 = vld [vmem:[%s2] sm:$0x1]
      %v281 = vlaneseq
      %v282 = vshrl.u32 %v281, 7
      %v283 = vsub.s32 0, %v282
      %v284 = vrot.slane %v279, %v283
      %v286 = vadd.f32 %v271, %v284
      %v287 = vadd.f32 %v272, %v284
      %v288 = vadd.f32 %v273, %v284
      %v289 = vadd.f32 %v274, %v284
      %v290 = vadd.f32 %v275, %v284
      %v291 = vadd.f32 %v276, %v284
      %v292 = vadd.f32 %v277, %v284
      %v293 = vadd.f32 %v278, %v284
      %v294 = vmax.f32 %v286, 0.0
      %v295 = vmax.f32 %v287, 0.0
      %v296 = vmax.f32 %v288, 0.0
      %v297 = vmax.f32 %v289, 0.0
      %v298 = vmax.f32 %v290, 0.0
      %v299 = vmax.f32 %v291, 0.0
      %v300 = vmax.f32 %v292, 0.0
      %v301 = vmax.f32 %v293, 0.0
      %s302 = scalar_lea.vmem [#allocation2], 16
      %303 = vst [vmem:[%s302 + $0x1] sm:$0xff] %v294
      %304 = vst [vmem:[%s302 + $0x11] sm:$0xff] %v295
      %305 = vst [vmem:[%s302 + $0x21] sm:$0xff] %v296
      %306 = vst [vmem:[%s302 + $0x31] sm:$0xff] %v297
      %307 = vst [vmem:[%s302 + $0x41] sm:$0xff] %v298
      %308 = vst [vmem:[%s302 + $0x51] sm:$0xff] %v299
      %309 = vst [vmem:[%s302 + $0x61] sm:$0xff] %v300
      %310 = vst [vmem:[%s302 + $0x71] sm:$0xff] %v301
      %v311 = vld [vmem:[#allocation2] sm:$0xff]
      %v312 = vld [vmem:[#allocation2 + $0x10] sm:$0xff]
      %v313 = vld [vmem:[#allocation2 + $0x20] sm:$0xff]
      %v314 = vld [vmem:[#allocation2 + $0x30] sm:$0xff]
      %v315 = vld [vmem:[#allocation2 + $0x40] sm:$0xff]
      %v316 = vld [vmem:[#allocation2 + $0x50] sm:$0xff]
      %v317 = vld [vmem:[#allocation2 + $0x60] sm:$0xff]
      %v318 = vld [vmem:[#allocation2 + $0x70] sm:$0xff]
      %v319 = vld [vmem:[#allocation2 + $0x80] sm:$0xff]
      %v320 = vld [vmem:[#allocation2 + $0x90] sm:$0xff]
      %321 = vst [vmem:[#allocation3] sm:$0xff] %v311
      %322 = vst [vmem:[#allocation3 + $0x18] sm:$0xff] %v312
      %323 = vst [vmem:[#allocation3 + $0x30] sm:$0xff] %v313
      %324 = vst [vmem:[#allocation3 + $0x48] sm:$0xff] %v314
      %325 = vst [vmem:[#allocation3 + $0x60] sm:$0xff] %v315
      %326 = vst [vmem:[#allocation3 + $0x78] sm:$0xff] %v316
      %327 = vst [vmem:[#allocation3 + $0x90] sm:$0xff] %v317
      %328 = vst [vmem:[#allocation3 + $0xa8] sm:$0xff] %v318
      %329 = vst [vmem:[#allocation3 + $0xc0] sm:$0xff] %v319
      %330 = vst [vmem:[#allocation3 + $0xd8] sm:$0xff] %v320
      %v331 = vld [vmem:[#allocation2 + $0x1] sm:$0xff]
      %v332 = vld [vmem:[#allocation2 + $0x11] sm:$0xff]
      %v333 = vld [vmem:[#allocation2 + $0x21] sm:$0xff]
      %v334 = vld [vmem:[#allocation2 + $0x31] sm:$0xff]
      %v335 = vld [vmem:[#allocation2 + $0x41] sm:$0xff]
      %v336 = vld [vmem:[#allocation2 + $0x51] sm:$0xff]
      %v337 = vld [vmem:[#allocation2 + $0x61] sm:$0xff]
      %v338 = vld [vmem:[#allocation2 + $0x71] sm:$0xff]
      %v339 = vld [vmem:[#allocation2 + $0x81] sm:$0xff]
      %v340 = vld [vmem:[#allocation2 + $0x91] sm:$0xff]
      %341 = vst [vmem:[#allocation3 + $0x8] sm:$0xff] %v331
      %342 = vst [vmem:[#allocation3 + $0x20] sm:$0xff] %v332
      %343 = vst [vmem:[#allocation3 + $0x38] sm:$0xff] %v333
      %344 = vst [vmem:[#allocation3 + $0x50] sm:$0xff] %v334
      %345 = vst [vmem:[#allocation3 + $0x68] sm:$0xff] %v335
      %346 = vst [vmem:[#allocation3 + $0x80] sm:$0xff] %v336
      %347 = vst [vmem:[#allocation3 + $0x98] sm:$0xff] %v337
      %348 = vst [vmem:[#allocation3 + $0xb0] sm:$0xff] %v338
      %349 = vst [vmem:[#allocation3 + $0xc8] sm:$0xff] %v339
      %350 = vst [vmem:[#allocation3 + $0xe0] sm:$0xff] %v340
      %v351 = vld [vmem:[#allocation2 + $0x2] sm:$0xff]
      %v352 = vld [vmem:[#allocation2 + $0x12] sm:$0xff]
      %v353 = vld [vmem:[#allocation2 + $0x22] sm:$0xff]
      %v354 = vld [vmem:[#allocation2 + $0x32] sm:$0xff]
      %v355 = vld [vmem:[#allocation2 + $0x42] sm:$0xff]
      %v356 = vld [vmem:[#allocation2 + $0x52] sm:$0xff]
      %v357 = vld [vmem:[#allocation2 + $0x62] sm:$0xff]
      %v358 = vld [vmem:[#allocation2 + $0x72] sm:$0xff]
      %v359 = vld [vmem:[#allocation2 + $0x82] sm:$0xff]
      %v360 = vld [vmem:[#allocation2 + $0x92] sm:$0xff]
      %361 = vst [vmem:[#allocation3 + $0x10] sm:$0xff] %v351
      %362 = vst [vmem:[#allocation3 + $0x28] sm:$0xff] %v352
      %363 = vst [vmem:[#allocation3 + $0x40] sm:$0xff] %v353
      %364 = vst [vmem:[#allocation3 + $0x58] sm:$0xff] %v354
      %365 = vst [vmem:[#allocation3 + $0x70] sm:$0xff] %v355
      %366 = vst [vmem:[#allocation3 + $0x88] sm:$0xff] %v356
      %367 = vst [vmem:[#allocation3 + $0xa0] sm:$0xff] %v357
      %368 = vst [vmem:[#allocation3 + $0xb8] sm:$0xff] %v358
      %369 = vst [vmem:[#allocation3 + $0xd0] sm:$0xff] %v359
      %370 = vst [vmem:[#allocation3 + $0xe8] sm:$0xff] %v360
      %v371 = vld [vmem:[#allocation3] sm:$0xff]
      %v372 = vld [vmem:[#allocation3 + $0x8] sm:$0xff]
      %v373 = vld [vmem:[#allocation3 + $0x10] sm:$0xff]
      %v374 = vld [vmem:[#allocation3 + $0x18] sm:$0xff]
      %v375 = vld [vmem:[#allocation3 + $0x20] sm:$0xff]
      %v376 = vld [vmem:[#allocation3 + $0x28] sm:$0xff]
      %v377 = vld [vmem:[#allocation3 + $0x30] sm:$0xff]
      %v378 = vld [vmem:[#allocation3 + $0x38] sm:$0xff]
      %v379 = vld [vmem:[#allocation3 + $0x40] sm:$0xff]
      %v380 = vld [vmem:[#allocation3 + $0x48] sm:$0xff]
      %v381 = vld [vmem:[#allocation3 + $0x50] sm:$0xff]
      %v382 = vld [vmem:[#allocation3 + $0x58] sm:$0xff]
      %v383 = vld [vmem:[#allocation3 + $0x60] sm:$0xff]
      %v384 = vld [vmem:[#allocation3 + $0x68] sm:$0xff]
      %v385 = vld [vmem:[#allocation3 + $0x70] sm:$0xff]
      %v386 = vld [vmem:[#allocation3 + $0x78] sm:$0xff]
      %v387 = vld [vmem:[#allocation3 + $0x80] sm:$0xff]
      %v388 = vld [vmem:[#allocation3 + $0x88] sm:$0xff]
      %v389 = vld [vmem:[#allocation3 + $0x90] sm:$0xff]
      %v390 = vld [vmem:[#allocation3 + $0x98] sm:$0xff]
      %v391 = vld [vmem:[#allocation3 + $0xa0] sm:$0xff]
      %v392 = vld [vmem:[#allocation3 + $0xa8] sm:$0xff]
      %v393 = vld [vmem:[#allocation3 + $0xb0] sm:$0xff]
      %v394 = vld [vmem:[#allocation3 + $0xb8] sm:$0xff]
      %v395 = vld [vmem:[%s3] sm:$0xff]
      %v396 = vld [vmem:[%s3 + $0x8] sm:$0xff]
      %v397 = vld [vmem:[%s3 + $0x10] sm:$0xff]
      %v398 = vld [vmem:[%s3 + $0x18] sm:$0xff]
      %v399 = vld [vmem:[%s3 + $0x20] sm:$0xff]
      %v400 = vld [vmem:[%s3 + $0x28] sm:$0xff]
      %v401 = vld [vmem:[%s3 + $0x30] sm:$0xff]
      %v402 = vld [vmem:[%s3 + $0x38] sm:$0xff]
      %v403 = vld [vmem:[%s3 + $0x40] sm:$0xff]
      %v404 = vld [vmem:[%s3 + $0x48] sm:$0xff]
      %v405 = vld [vmem:[%s3 + $0x50] sm:$0xff]
      %v406 = vld [vmem:[%s3 + $0x58] sm:$0xff]
      %v407 = vld [vmem:[%s3 + $0x60] sm:$0xff]
      %v408 = vld [vmem:[%s3 + $0x68] sm:$0xff]
      %v409 = vld [vmem:[%s3 + $0x70] sm:$0xff]
      %v410 = vld [vmem:[%s3 + $0x78] sm:$0xff]
      %v411 = vld [vmem:[%s3 + $0x80] sm:$0xff]
      %v412 = vld [vmem:[%s3 + $0x88] sm:$0xff]
      %v413 = vld [vmem:[%s3 + $0x90] sm:$0xff]
      %v414 = vld [vmem:[%s3 + $0x98] sm:$0xff]
      %v415 = vld [vmem:[%s3 + $0xa0] sm:$0xff]
      %v416 = vld [vmem:[%s3 + $0xa8] sm:$0xff]
      %v417 = vld [vmem:[%s3 + $0xb0] sm:$0xff]
      %v418 = vld [vmem:[%s3 + $0xb8] sm:$0xff]
      %v419 = vld [vmem:[%s3 + $0xc0] sm:$0xff]
      %v420 = vld [vmem:[%s3 + $0xc8] sm:$0xff]
      %v421 = vld [vmem:[%s3 + $0xd0] sm:$0xff]
      %v422 = vld [vmem:[%s3 + $0xd8] sm:$0xff]
      %v423 = vld [vmem:[%s3 + $0xe0] sm:$0xff]
      %v424 = vld [vmem:[%s3 + $0xe8] sm:$0xff]
      %v425 = vld [vmem:[%s3 + $0xf0] sm:$0xff]
      %v426 = vld [vmem:[%s3 + $0xf8] sm:$0xff]
      %v427 = vld [vmem:[%s3 + $0x100] sm:$0xff]
      %v428 = vld [vmem:[%s3 + $0x108] sm:$0xff]
      %v429 = vld [vmem:[%s3 + $0x110] sm:$0xff]
      %v430 = vld [vmem:[%s3 + $0x118] sm:$0xff]
      %v431 = vld [vmem:[%s3 + $0x120] sm:$0xff]
      %v432 = vld [vmem:[%s3 + $0x128] sm:$0xff]
      %v433 = vld [vmem:[%s3 + $0x130] sm:$0xff]
      %v434 = vld [vmem:[%s3 + $0x138] sm:$0xff]
      %v435 = vld [vmem:[%s3 + $0x140] sm:$0xff]
      %v436 = vld [vmem:[%s3 + $0x148] sm:$0xff]
      %v437 = vld [vmem:[%s3 + $0x150] sm:$0xff]
      %v438 = vld [vmem:[%s3 + $0x158] sm:$0xff]
      %v439 = vld [vmem:[%s3 + $0x160] sm:$0xff]
      %v440 = vld [vmem:[%s3 + $0x168] sm:$0xff]
      %v441 = vld [vmem:[%s3 + $0x170] sm:$0xff]
      %v442 = vld [vmem:[%s3 + $0x178] sm:$0xff]
      %s443 = scalar_lea.vmem [#allocation3], 24
      %v444 = vld [vmem:[%s443] sm:$0xff]
      %v445 = vld [vmem:[%s443 + $0x8] sm:$0xff]
      %v446 = vld [vmem:[%s443 + $0x10] sm:$0xff]
      %v447 = vld [vmem:[%s443 + $0x18] sm:$0xff]
      %v448 = vld [vmem:[%s443 + $0x20] sm:$0xff]
      %v449 = vld [vmem:[%s443 + $0x28] sm:$0xff]
      %v450 = vld [vmem:[%s443 + $0x30] sm:$0xff]
      %v451 = vld [vmem:[%s443 + $0x38] sm:$0xff]
      %v452 = vld [vmem:[%s443 + $0x40] sm:$0xff]
      %v453 = vld [vmem:[%s443 + $0x48] sm:$0xff]
      %v454 = vld [vmem:[%s443 + $0x50] sm:$0xff]
      %v455 = vld [vmem:[%s443 + $0x58] sm:$0xff]
      %v456 = vld [vmem:[%s443 + $0x60] sm:$0xff]
      %v457 = vld [vmem:[%s443 + $0x68] sm:$0xff]
      %v458 = vld [vmem:[%s443 + $0x70] sm:$0xff]
      %v459 = vld [vmem:[%s443 + $0x78] sm:$0xff]
      %v460 = vld [vmem:[%s443 + $0x80] sm:$0xff]
      %v461 = vld [vmem:[%s443 + $0x88] sm:$0xff]
      %v462 = vld [vmem:[%s443 + $0x90] sm:$0xff]
      %v463 = vld [vmem:[%s443 + $0x98] sm:$0xff]
      %v464 = vld [vmem:[%s443 + $0xa0] sm:$0xff]
      %v465 = vld [vmem:[%s443 + $0xa8] sm:$0xff]
      %v466 = vld [vmem:[%s443 + $0xb0] sm:$0xff]
      %v467 = vld [vmem:[%s443 + $0xb8] sm:$0xff]
      %s468 = scalar_lea.vmem %s3, 384
      %v469 = vld [vmem:[%s468] sm:$0xff]
      %v470 = vld [vmem:[%s468 + $0x8] sm:$0xff]
      %v471 = vld [vmem:[%s468 + $0x10] sm:$0xff]
      %v472 = vld [vmem:[%s468 + $0x18] sm:$0xff]
      %v473 = vld [vmem:[%s468 + $0x20] sm:$0xff]
      %v474 = vld [vmem:[%s468 + $0x28] sm:$0xff]
      %v475 = vld [vmem:[%s468 + $0x30] sm:$0xff]
      %v476 = vld [vmem:[%s468 + $0x38] sm:$0xff]
      %v477 = vld [vmem:[%s468 + $0x40] sm:$0xff]
      %v478 = vld [vmem:[%s468 + $0x48] sm:$0xff]
      %v479 = vld [vmem:[%s468 + $0x50] sm:$0xff]
      %v480 = vld [vmem:[%s468 + $0x58] sm:$0xff]
      %v481 = vld [vmem:[%s468 + $0x60] sm:$0xff]
      %v482 = vld [vmem:[%s468 + $0x68] sm:$0xff]
      %v483 = vld [vmem:[%s468 + $0x70] sm:$0xff]
      %v484 = vld [vmem:[%s468 + $0x78] sm:$0xff]
      %v485 = vld [vmem:[%s468 + $0x80] sm:$0xff]
      %v486 = vld [vmem:[%s468 + $0x88] sm:$0xff]
      %v487 = vld [vmem:[%s468 + $0x90] sm:$0xff]
      %v488 = vld [vmem:[%s468 + $0x98] sm:$0xff]
      %v489 = vld [vmem:[%s468 + $0xa0] sm:$0xff]
      %v490 = vld [vmem:[%s468 + $0xa8] sm:$0xff]
      %v491 = vld [vmem:[%s468 + $0xb0] sm:$0xff]
      %v492 = vld [vmem:[%s468 + $0xb8] sm:$0xff]
      %v493 = vld [vmem:[%s468 + $0xc0] sm:$0xff]
      %v494 = vld [vmem:[%s468 + $0xc8] sm:$0xff]
      %v495 = vld [vmem:[%s468 + $0xd0] sm:$0xff]
      %v496 = vld [vmem:[%s468 + $0xd8] sm:$0xff]
      %v497 = vld [vmem:[%s468 + $0xe0] sm:$0xff]
      %v498 = vld [vmem:[%s468 + $0xe8] sm:$0xff]
      %v499 = vld [vmem:[%s468 + $0xf0] sm:$0xff]
      %v500 = vld [vmem:[%s468 + $0xf8] sm:$0xff]
      %v501 = vld [vmem:[%s468 + $0x100] sm:$0xff]
      %v502 = vld [vmem:[%s468 + $0x108] sm:$0xff]
      %v503 = vld [vmem:[%s468 + $0x110] sm:$0xff]
      %v504 = vld [vmem:[%s468 + $0x118] sm:$0xff]
      %v505 = vld [vmem:[%s468 + $0x120] sm:$0xff]
      %v506 = vld [vmem:[%s468 + $0x128] sm:$0xff]
      %v507 = vld [vmem:[%s468 + $0x130] sm:$0xff]
      %v508 = vld [vmem:[%s468 + $0x138] sm:$0xff]
      %v509 = vld [vmem:[%s468 + $0x140] sm:$0xff]
      %v510 = vld [vmem:[%s468 + $0x148] sm:$0xff]
      %v511 = vld [vmem:[%s468 + $0x150] sm:$0xff]
      %v512 = vld [vmem:[%s468 + $0x158] sm:$0xff]
      %v513 = vld [vmem:[%s468 + $0x160] sm:$0xff]
      %v514 = vld [vmem:[%s468 + $0x168] sm:$0xff]
      %v515 = vld [vmem:[%s468 + $0x170] sm:$0xff]
      %v516 = vld [vmem:[%s468 + $0x178] sm:$0xff]
      %517 = vmatprep.subr.mxu0 0.0
      %518 = vmatpush1.msra.mxu0 %v484
      %519 = vmatprep.subr.mxu0 0.0
      %520 = vmatpush1.msra.mxu0 %v483
      %521 = vmatprep.subr.mxu0 0.0
      %522 = vmatpush1.msra.mxu0 %v482
      %523 = vmatprep.subr.mxu0 0.0
      %524 = vmatpush1.msra.mxu0 %v481
      %525 = vmatprep.subr.mxu0 0.0
      %526 = vmatpush1.msra.mxu0 %v480
      %527 = vmatprep.subr.mxu0 0.0
      %528 = vmatpush1.msra.mxu0 %v479
      %529 = vmatprep.subr.mxu0 0.0
      %530 = vmatpush1.msra.mxu0 %v478
      %531 = vmatprep.subr.mxu0 0.0
      %532 = vmatpush1.msra.mxu0 %v477
      %533 = vmatprep.subr.mxu0 0.0
      %534 = vmatpush1.msra.mxu0 %v476
      %535 = vmatprep.subr.mxu0 0.0
      %536 = vmatpush1.msra.mxu0 %v475
      %537 = vmatprep.subr.mxu0 0.0
      %538 = vmatpush1.msra.mxu0 %v474
      %539 = vmatprep.subr.mxu0 0.0
      %540 = vmatpush1.msra.mxu0 %v473
      %541 = vmatprep.subr.mxu0 0.0
      %542 = vmatpush1.msra.mxu0 %v472
      %543 = vmatprep.subr.mxu0 0.0
      %544 = vmatpush1.msra.mxu0 %v471
      %545 = vmatprep.subr.mxu0 0.0
      %546 = vmatpush1.msra.mxu0 %v470
      %547 = vmatprep.subr.mxu0 0.0
      %548 = vmatpush1.msra.mxu0 %v469
      %549 = vmatprep.subr.mxu0 0.0
      %550 = vmatpush2.msra.mxu0 %v500
      %551 = vmatprep.subr.mxu0 0.0
      %552 = vmatpush2.msra.mxu0 %v499
      %553 = vmatprep.subr.mxu0 0.0
      %554 = vmatpush2.msra.mxu0 %v498
      %555 = vmatprep.subr.mxu0 0.0
      %556 = vmatpush2.msra.mxu0 %v497
      %557 = vmatprep.subr.mxu0 0.0
      %558 = vmatpush2.msra.mxu0 %v496
      %559 = vmatprep.subr.mxu0 0.0
      %560 = vmatpush2.msra.mxu0 %v495
      %561 = vmatprep.subr.mxu0 0.0
      %562 = vmatpush2.msra.mxu0 %v494
      %563 = vmatprep.subr.mxu0 0.0
      %564 = vmatpush2.msra.mxu0 %v493
      %565 = vmatprep.subr.mxu0 0.0
      %566 = vmatpush2.msra.mxu0 %v492
      %567 = vmatprep.subr.mxu0 0.0
      %568 = vmatpush2.msra.mxu0 %v491
      %569 = vmatprep.subr.mxu0 0.0
      %570 = vmatpush2.msra.mxu0 %v490
      %571 = vmatprep.subr.mxu0 0.0
      %572 = vmatpush2.msra.mxu0 %v489
      %573 = vmatprep.subr.mxu0 0.0
      %574 = vmatpush2.msra.mxu0 %v488
      %575 = vmatprep.subr.mxu0 0.0
      %576 = vmatpush2.msra.mxu0 %v487
      %577 = vmatprep.subr.mxu0 0.0
      %578 = vmatpush2.msra.mxu0 %v486
      %579 = vmatprep.subr.mxu0 0.0
      %580 = vmatpush2.msra.mxu0 %v485
      %581 = vmatprep.mubr.f32.mxu0 %v445
      %582 = vmatmul.mubr.f32.gmra.mxu0 %v444
      %v583 = vpop.f32.mrf.mxu0
      %v584 = vadd.f32 0.0, %v583
      %v585 = vpop.f32.mrf.mxu0
      %586 = vmatprep.mubr.f32.mxu0 %v448
      %587 = vmatmul.mubr.f32.gmra.mxu0 %v447
      %v588 = vpop.f32.mrf.mxu0
      %v589 = vadd.f32 0.0, %v588
      %v590 = vpop.f32.mrf.mxu0
      %591 = vmatprep.mubr.f32.mxu0 %v451
      %592 = vmatmul.mubr.f32.gmra.mxu0 %v450
      %v593 = vpop.f32.mrf.mxu0
      %v594 = vadd.f32 0.0, %v593
      %v595 = vpop.f32.mrf.mxu0
      %596 = vmatprep.mubr.f32.mxu0 %v454
      %597 = vmatmul.mubr.f32.gmra.mxu0 %v453
      %v598 = vpop.f32.mrf.mxu0
      %v599 = vadd.f32 0.0, %v598
      %v600 = vpop.f32.mrf.mxu0
      %601 = vmatprep.mubr.f32.mxu0 %v457
      %602 = vmatmul.mubr.f32.gmra.mxu0 %v456
      %v603 = vpop.f32.mrf.mxu0
      %v604 = vadd.f32 0.0, %v603
      %v605 = vpop.f32.mrf.mxu0
      %606 = vmatprep.mubr.f32.mxu0 %v460
      %607 = vmatmul.mubr.f32.gmra.mxu0 %v459
      %v608 = vpop.f32.mrf.mxu0
      %v609 = vadd.f32 0.0, %v608
      %v610 = vpop.f32.mrf.mxu0
      %611 = vmatprep.mubr.f32.mxu0 %v463
      %612 = vmatmul.mubr.f32.gmra.mxu0 %v462
      %v613 = vpop.f32.mrf.mxu0
      %v614 = vadd.f32 0.0, %v613
      %v615 = vpop.f32.mrf.mxu0
      %616 = vmatprep.mubr.f32.mxu0 %v466
      %617 = vmatmul.mubr.f32.gmra.mxu0 %v465
      %v618 = vpop.f32.mrf.mxu0
      %v619 = vadd.f32 0.0, %v618
      %v620 = vpop.f32.mrf.mxu0
      %621 = vdwg.mxu0
      %622 = vmatprep.subr.mxu0 0.0
      %623 = vmatpush1.msra.mxu0 %v516
      %624 = vmatprep.subr.mxu0 0.0
      %625 = vmatpush1.msra.mxu0 %v515
      %626 = vmatprep.subr.mxu0 0.0
      %627 = vmatpush1.msra.mxu0 %v514
      %628 = vmatprep.subr.mxu0 0.0
      %629 = vmatpush1.msra.mxu0 %v513
      %630 = vmatprep.subr.mxu0 0.0
      %631 = vmatpush1.msra.mxu0 %v512
      %632 = vmatprep.subr.mxu0 0.0
      %633 = vmatpush1.msra.mxu0 %v511
      %634 = vmatprep.subr.mxu0 0.0
      %635 = vmatpush1.msra.mxu0 %v510
      %636 = vmatprep.subr.mxu0 0.0
      %637 = vmatpush1.msra.mxu0 %v509
      %638 = vmatprep.subr.mxu0 0.0
      %639 = vmatpush1.msra.mxu0 %v508
      %640 = vmatprep.subr.mxu0 0.0
      %641 = vmatpush1.msra.mxu0 %v507
      %642 = vmatprep.subr.mxu0 0.0
      %643 = vmatpush1.msra.mxu0 %v506
      %644 = vmatprep.subr.mxu0 0.0
      %645 = vmatpush1.msra.mxu0 %v505
      %646 = vmatprep.subr.mxu0 0.0
      %647 = vmatpush1.msra.mxu0 %v504
      %648 = vmatprep.subr.mxu0 0.0
      %649 = vmatpush1.msra.mxu0 %v503
      %650 = vmatprep.subr.mxu0 0.0
      %651 = vmatpush1.msra.mxu0 %v502
      %652 = vmatprep.subr.mxu0 0.0
      %653 = vmatpush1.msra.mxu0 %v501
      %654 = vmatprep.subr.mxu0 0.0
      %655 = vmatpush2.msra.mxu0 0.0
      %656 = vmatprep.subr.mxu0 0.0
      %657 = vmatpush2.msra.mxu0 0.0
      %658 = vmatprep.subr.mxu0 0.0
      %659 = vmatpush2.msra.mxu0 0.0
      %660 = vmatprep.subr.mxu0 0.0
      %661 = vmatpush2.msra.mxu0 0.0
      %662 = vmatprep.subr.mxu0 0.0
      %663 = vmatpush2.msra.mxu0 0.0
      %664 = vmatprep.subr.mxu0 0.0
      %665 = vmatpush2.msra.mxu0 0.0
      %666 = vmatprep.subr.mxu0 0.0
      %667 = vmatpush2.msra.mxu0 0.0
      %668 = vmatprep.subr.mxu0 0.0
      %669 = vmatpush2.msra.mxu0 0.0
      %670 = vmatprep.subr.mxu0 0.0
      %671 = vmatpush2.msra.mxu0 0.0
      %672 = vmatprep.subr.mxu0 0.0
      %673 = vmatpush2.msra.mxu0 0.0
      %674 = vmatprep.subr.mxu0 0.0
      %675 = vmatpush2.msra.mxu0 0.0
      %676 = vmatprep.subr.mxu0 0.0
      %677 = vmatpush2.msra.mxu0 0.0
      %678 = vmatprep.subr.mxu0 0.0
      %679 = vmatpush2.msra.mxu0 0.0
      %680 = vmatprep.subr.mxu0 0.0
      %681 = vmatpush2.msra.mxu0 0.0
      %682 = vmatprep.subr.mxu0 0.0
      %683 = vmatpush2.msra.mxu0 0.0
      %684 = vmatprep.subr.mxu0 0.0
      %685 = vmatpush2.msra.mxu0 0.0
      %686 = vmatprep.mubr.f32.mxu0 0.0
      %687 = vmatmul.mubr.f32.gmra.mxu0 %v446
      %v688 = vpop.f32.mrf.mxu0
      %v689 = vadd.f32 %v584, %v688
      %v690 = vpop.f32.mrf.mxu0
      %691 = vmatprep.mubr.f32.mxu0 0.0
      %692 = vmatmul.mubr.f32.gmra.mxu0 %v449
      %v693 = vpop.f32.mrf.mxu0
      %v694 = vadd.f32 %v589, %v693
      %v695 = vpop.f32.mrf.mxu0
      %696 = vmatprep.mubr.f32.mxu0 0.0
      %697 = vmatmul.mubr.f32.gmra.mxu0 %v452
      %v698 = vpop.f32.mrf.mxu0
      %v699 = vadd.f32 %v594, %v698
      %v700 = vpop.f32.mrf.mxu0
      %701 = vmatprep.mubr.f32.mxu0 0.0
      %702 = vmatmul.mubr.f32.gmra.mxu0 %v455
      %v703 = vpop.f32.mrf.mxu0
      %v704 = vadd.f32 %v599, %v703
      %v705 = vpop.f32.mrf.mxu0
      %706 = vmatprep.mubr.f32.mxu0 0.0
      %707 = vmatmul.mubr.f32.gmra.mxu0 %v458
      %v708 = vpop.f32.mrf.mxu0
      %v709 = vadd.f32 %v604, %v708
      %v710 = vpop.f32.mrf.mxu0
      %711 = vmatprep.mubr.f32.mxu0 0.0
      %712 = vmatmul.mubr.f32.gmra.mxu0 %v461
      %v713 = vpop.f32.mrf.mxu0
      %v714 = vadd.f32 %v609, %v713
      %v715 = vpop.f32.mrf.mxu0
      %716 = vmatprep.mubr.f32.mxu0 0.0
      %717 = vmatmul.mubr.f32.gmra.mxu0 %v464
      %v718 = vpop.f32.mrf.mxu0
      %v719 = vadd.f32 %v614, %v718
      %v720 = vpop.f32.mrf.mxu0
      %721 = vmatprep.mubr.f32.mxu0 0.0
      %722 = vmatmul.mubr.f32.gmra.mxu0 %v467
      %v723 = vpop.f32.mrf.mxu0
      %v724 = vadd.f32 %v619, %v723
      %v725 = vpop.f32.mrf.mxu0
      %726 = vdwg.mxu0
      %727 = vmatprep.subr.mxu0 0.0
      %728 = vmatpush1.msra.mxu0 %v410
      %729 = vmatprep.subr.mxu0 0.0
      %730 = vmatpush1.msra.mxu0 %v409
      %731 = vmatprep.subr.mxu0 0.0
      %732 = vmatpush1.msra.mxu0 %v408
      %733 = vmatprep.subr.mxu0 0.0
      %734 = vmatpush1.msra.mxu0 %v407
      %735 = vmatprep.subr.mxu0 0.0
      %736 = vmatpush1.msra.mxu0 %v406
      %737 = vmatprep.subr.mxu0 0.0
      %738 = vmatpush1.msra.mxu0 %v405
      %739 = vmatprep.subr.mxu0 0.0
      %740 = vmatpush1.msra.mxu0 %v404
      %741 = vmatprep.subr.mxu0 0.0
      %742 = vmatpush1.msra.mxu0 %v403
      %743 = vmatprep.subr.mxu0 0.0
      %744 = vmatpush1.msra.mxu0 %v402
      %745 = vmatprep.subr.mxu0 0.0
      %746 = vmatpush1.msra.mxu0 %v401
      %747 = vmatprep.subr.mxu0 0.0
      %748 = vmatpush1.msra.mxu0 %v400
      %749 = vmatprep.subr.mxu0 0.0
      %750 = vmatpush1.msra.mxu0 %v399
      %751 = vmatprep.subr.mxu0 0.0
      %752 = vmatpush1.msra.mxu0 %v398
      %753 = vmatprep.subr.mxu0 0.0
      %754 = vmatpush1.msra.mxu0 %v397
      %755 = vmatprep.subr.mxu0 0.0
      %756 = vmatpush1.msra.mxu0 %v396
      %757 = vmatprep.subr.mxu0 0.0
      %758 = vmatpush1.msra.mxu0 %v395
      %759 = vmatprep.subr.mxu0 0.0
      %760 = vmatpush2.msra.mxu0 %v426
      %761 = vmatprep.subr.mxu0 0.0
      %762 = vmatpush2.msra.mxu0 %v425
      %763 = vmatprep.subr.mxu0 0.0
      %764 = vmatpush2.msra.mxu0 %v424
      %765 = vmatprep.subr.mxu0 0.0
      %766 = vmatpush2.msra.mxu0 %v423
      %767 = vmatprep.subr.mxu0 0.0
      %768 = vmatpush2.msra.mxu0 %v422
      %769 = vmatprep.subr.mxu0 0.0
      %770 = vmatpush2.msra.mxu0 %v421
      %771 = vmatprep.subr.mxu0 0.0
      %772 = vmatpush2.msra.mxu0 %v420
      %773 = vmatprep.subr.mxu0 0.0
      %774 = vmatpush2.msra.mxu0 %v419
      %775 = vmatprep.subr.mxu0 0.0
      %776 = vmatpush2.msra.mxu0 %v418
      %777 = vmatprep.subr.mxu0 0.0
      %778 = vmatpush2.msra.mxu0 %v417
      %779 = vmatprep.subr.mxu0 0.0
      %780 = vmatpush2.msra.mxu0 %v416
      %781 = vmatprep.subr.mxu0 0.0
      %782 = vmatpush2.msra.mxu0 %v415
      %783 = vmatprep.subr.mxu0 0.0
      %784 = vmatpush2.msra.mxu0 %v414
      %785 = vmatprep.subr.mxu0 0.0
      %786 = vmatpush2.msra.mxu0 %v413
      %787 = vmatprep.subr.mxu0 0.0
      %788 = vmatpush2.msra.mxu0 %v412
      %789 = vmatprep.subr.mxu0 0.0
      %790 = vmatpush2.msra.mxu0 %v411
      %791 = vmatprep.mubr.f32.mxu0 %v372
      %792 = vmatmul.mubr.f32.gmra.mxu0 %v371
      %v793 = vpop.f32.mrf.mxu0
      %v794 = vadd.f32 %v689, %v793
      %v795 = vpop.f32.mrf.mxu0
      %796 = vmatprep.mubr.f32.mxu0 %v375
      %797 = vmatmul.mubr.f32.gmra.mxu0 %v374
      %v798 = vpop.f32.mrf.mxu0
      %v799 = vadd.f32 %v694, %v798
      %v800 = vpop.f32.mrf.mxu0
      %801 = vmatprep.mubr.f32.mxu0 %v378
      %802 = vmatmul.mubr.f32.gmra.mxu0 %v377
      %v803 = vpop.f32.mrf.mxu0
      %v804 = vadd.f32 %v699, %v803
      %v805 = vpop.f32.mrf.mxu0
      %806 = vmatprep.mubr.f32.mxu0 %v381
      %807 = vmatmul.mubr.f32.gmra.mxu0 %v380
      %v808 = vpop.f32.mrf.mxu0
      %v809 = vadd.f32 %v704, %v808
      %v810 = vpop.f32.mrf.mxu0
      %811 = vmatprep.mubr.f32.mxu0 %v384
      %812 = vmatmul.mubr.f32.gmra.mxu0 %v383
      %v813 = vpop.f32.mrf.mxu0
      %v814 = vadd.f32 %v709, %v813
      %v815 = vpop.f32.mrf.mxu0
      %816 = vmatprep.mubr.f32.mxu0 %v387
      %817 = vmatmul.mubr.f32.gmra.mxu0 %v386
      %v818 = vpop.f32.mrf.mxu0
      %v819 = vadd.f32 %v714, %v818
      %v820 = vpop.f32.mrf.mxu0
      %821 = vmatprep.mubr.f32.mxu0 %v390
      %822 = vmatmul.mubr.f32.gmra.mxu0 %v389
      %v823 = vpop.f32.mrf.mxu0
      %v824 = vadd.f32 %v719, %v823
      %v825 = vpop.f32.mrf.mxu0
      %826 = vmatprep.mubr.f32.mxu0 %v393
      %827 = vmatmul.mubr.f32.gmra.mxu0 %v392
      %v828 = vpop.f32.mrf.mxu0
      %v829 = vadd.f32 %v724, %v828
      %v830 = vpop.f32.mrf.mxu0
      %831 = vdwg.mxu0
      %832 = vmatprep.subr.mxu0 0.0
      %833 = vmatpush1.msra.mxu0 %v442
      %834 = vmatprep.subr.mxu0 0.0
      %835 = vmatpush1.msra.mxu0 %v441
      %836 = vmatprep.subr.mxu0 0.0
      %837 = vmatpush1.msra.mxu0 %v440
      %838 = vmatprep.subr.mxu0 0.0
      %839 = vmatpush1.msra.mxu0 %v439
      %840 = vmatprep.subr.mxu0 0.0
      %841 = vmatpush1.msra.mxu0 %v438
      %842 = vmatprep.subr.mxu0 0.0
      %843 = vmatpush1.msra.mxu0 %v437
      %844 = vmatprep.subr.mxu0 0.0
      %845 = vmatpush1.msra.mxu0 %v436
      %846 = vmatprep.subr.mxu0 0.0
      %847 = vmatpush1.msra.mxu0 %v435
      %848 = vmatprep.subr.mxu0 0.0
      %849 = vmatpush1.msra.mxu0 %v434
      %850 = vmatprep.subr.mxu0 0.0
      %851 = vmatpush1.msra.mxu0 %v433
      %852 = vmatprep.subr.mxu0 0.0
      %853 = vmatpush1.msra.mxu0 %v432
      %854 = vmatprep.subr.mxu0 0.0
      %855 = vmatpush1.msra.mxu0 %v431
      %856 = vmatprep.subr.mxu0 0.0
      %857 = vmatpush1.msra.mxu0 %v430
      %858 = vmatprep.subr.mxu0 0.0
      %859 = vmatpush1.msra.mxu0 %v429
      %860 = vmatprep.subr.mxu0 0.0
      %861 = vmatpush1.msra.mxu0 %v428
      %862 = vmatprep.subr.mxu0 0.0
      %863 = vmatpush1.msra.mxu0 %v427
      %864 = vmatprep.subr.mxu0 0.0
      %865 = vmatpush2.msra.mxu0 0.0
      %866 = vmatprep.subr.mxu0 0.0
      %867 = vmatpush2.msra.mxu0 0.0
      %868 = vmatprep.subr.mxu0 0.0
      %869 = vmatpush2.msra.mxu0 0.0
      %870 = vmatprep.subr.mxu0 0.0
      %871 = vmatpush2.msra.mxu0 0.0
      %872 = vmatprep.subr.mxu0 0.0
      %873 = vmatpush2.msra.mxu0 0.0
      %874 = vmatprep.subr.mxu0 0.0
      %875 = vmatpush2.msra.mxu0 0.0
      %876 = vmatprep.subr.mxu0 0.0
      %877 = vmatpush2.msra.mxu0 0.0
      %878 = vmatprep.subr.mxu0 0.0
      %879 = vmatpush2.msra.mxu0 0.0
      %880 = vmatprep.subr.mxu0 0.0
      %881 = vmatpush2.msra.mxu0 0.0
      %882 = vmatprep.subr.mxu0 0.0
      %883 = vmatpush2.msra.mxu0 0.0
      %884 = vmatprep.subr.mxu0 0.0
      %885 = vmatpush2.msra.mxu0 0.0
      %886 = vmatprep.subr.mxu0 0.0
      %887 = vmatpush2.msra.mxu0 0.0
      %888 = vmatprep.subr.mxu0 0.0
      %889 = vmatpush2.msra.mxu0 0.0
      %890 = vmatprep.subr.mxu0 0.0
      %891 = vmatpush2.msra.mxu0 0.0
      %892 = vmatprep.subr.mxu0 0.0
      %893 = vmatpush2.msra.mxu0 0.0
      %894 = vmatprep.subr.mxu0 0.0
      %895 = vmatpush2.msra.mxu0 0.0
      %896 = vmatprep.mubr.f32.mxu0 0.0
      %897 = vmatmul.mubr.f32.gmra.mxu0 %v373
      %v898 = vpop.f32.mrf.mxu0
      %v899 = vadd.f32 %v794, %v898
      %v900 = vpop.f32.mrf.mxu0
      %901 = vmatprep.mubr.f32.mxu0 0.0
      %902 = vmatmul.mubr.f32.gmra.mxu0 %v376
      %v903 = vpop.f32.mrf.mxu0
      %v904 = vadd.f32 %v799, %v903
      %v905 = vpop.f32.mrf.mxu0
      %906 = vmatprep.mubr.f32.mxu0 0.0
      %907 = vmatmul.mubr.f32.gmra.mxu0 %v379
      %v908 = vpop.f32.mrf.mxu0
      %v909 = vadd.f32 %v804, %v908
      %v910 = vpop.f32.mrf.mxu0
      %911 = vmatprep.mubr.f32.mxu0 0.0
      %912 = vmatmul.mubr.f32.gmra.mxu0 %v382
      %v913 = vpop.f32.mrf.mxu0
      %v914 = vadd.f32 %v809, %v913
      %v915 = vpop.f32.mrf.mxu0
      %916 = vmatprep.mubr.f32.mxu0 0.0
      %917 = vmatmul.mubr.f32.gmra.mxu0 %v385
      %v918 = vpop.f32.mrf.mxu0
      %v919 = vadd.f32 %v814, %v918
      %v920 = vpop.f32.mrf.mxu0
      %921 = vmatprep.mubr.f32.mxu0 0.0
      %922 = vmatmul.mubr.f32.gmra.mxu0 %v388
      %v923 = vpop.f32.mrf.mxu0
      %v924 = vadd.f32 %v819, %v923
      %v925 = vpop.f32.mrf.mxu0
      %926 = vmatprep.mubr.f32.mxu0 0.0
      %927 = vmatmul.mubr.f32.gmra.mxu0 %v391
      %v928 = vpop.f32.mrf.mxu0
      %v929 = vadd.f32 %v824, %v928
      %v930 = vpop.f32.mrf.mxu0
      %931 = vmatprep.mubr.f32.mxu0 0.0
      %932 = vmatmul.mubr.f32.gmra.mxu0 %v394
      %v933 = vpop.f32.mrf.mxu0
      %v934 = vadd.f32 %v829, %v933
      %v935 = vpop.f32.mrf.mxu0
      %936 = vdwg.mxu0
      %s937 = scalar_lea.vmem [#allocation3], 48
      %v938 = vld [vmem:[%s937] sm:$0xff]
      %v939 = vld [vmem:[%s937 + $0x8] sm:$0xff]
      %v940 = vld [vmem:[%s937 + $0x10] sm:$0xff]
      %v941 = vld [vmem:[%s937 + $0x18] sm:$0xff]
      %v942 = vld [vmem:[%s937 + $0x20] sm:$0xff]
      %v943 = vld [vmem:[%s937 + $0x28] sm:$0xff]
      %v944 = vld [vmem:[%s937 + $0x30] sm:$0xff]
      %v945 = vld [vmem:[%s937 + $0x38] sm:$0xff]
      %v946 = vld [vmem:[%s937 + $0x40] sm:$0xff]
      %v947 = vld [vmem:[%s937 + $0x48] sm:$0xff]
      %v948 = vld [vmem:[%s937 + $0x50] sm:$0xff]
      %v949 = vld [vmem:[%s937 + $0x58] sm:$0xff]
      %v950 = vld [vmem:[%s937 + $0x60] sm:$0xff]
      %v951 = vld [vmem:[%s937 + $0x68] sm:$0xff]
      %v952 = vld [vmem:[%s937 + $0x70] sm:$0xff]
      %v953 = vld [vmem:[%s937 + $0x78] sm:$0xff]
      %v954 = vld [vmem:[%s937 + $0x80] sm:$0xff]
      %v955 = vld [vmem:[%s937 + $0x88] sm:$0xff]
      %v956 = vld [vmem:[%s937 + $0x90] sm:$0xff]
      %v957 = vld [vmem:[%s937 + $0x98] sm:$0xff]
      %v958 = vld [vmem:[%s937 + $0xa0] sm:$0xff]
      %v959 = vld [vmem:[%s937 + $0xa8] sm:$0xff]
      %v960 = vld [vmem:[%s937 + $0xb0] sm:$0xff]
      %v961 = vld [vmem:[%s937 + $0xb8] sm:$0xff]
      %s962 = scalar_lea.vmem %s3, 768
      %v963 = vld [vmem:[%s962] sm:$0xff]
      %v964 = vld [vmem:[%s962 + $0x8] sm:$0xff]
      %v965 = vld [vmem:[%s962 + $0x10] sm:$0xff]
      %v966 = vld [vmem:[%s962 + $0x18] sm:$0xff]
      %v967 = vld [vmem:[%s962 + $0x20] sm:$0xff]
      %v968 = vld [vmem:[%s962 + $0x28] sm:$0xff]
      %v969 = vld [vmem:[%s962 + $0x30] sm:$0xff]
      %v970 = vld [vmem:[%s962 + $0x38] sm:$0xff]
      %v971 = vld [vmem:[%s962 + $0x40] sm:$0xff]
      %v972 = vld [vmem:[%s962 + $0x48] sm:$0xff]
      %v973 = vld [vmem:[%s962 + $0x50] sm:$0xff]
      %v974 = vld [vmem:[%s962 + $0x58] sm:$0xff]
      %v975 = vld [vmem:[%s962 + $0x60] sm:$0xff]
      %v976 = vld [vmem:[%s962 + $0x68] sm:$0xff]
      %v977 = vld [vmem:[%s962 + $0x70] sm:$0xff]
      %v978 = vld [vmem:[%s962 + $0x78] sm:$0xff]
      %v979 = vld [vmem:[%s962 + $0x80] sm:$0xff]
      %v980 = vld [vmem:[%s962 + $0x88] sm:$0xff]
      %v981 = vld [vmem:[%s962 + $0x90] sm:$0xff]
      %v982 = vld [vmem:[%s962 + $0x98] sm:$0xff]
      %v983 = vld [vmem:[%s962 + $0xa0] sm:$0xff]
      %v984 = vld [vmem:[%s962 + $0xa8] sm:$0xff]
      %v985 = vld [vmem:[%s962 + $0xb0] sm:$0xff]
      %v986 = vld [vmem:[%s962 + $0xb8] sm:$0xff]
      %v987 = vld [vmem:[%s962 + $0xc0] sm:$0xff]
      %v988 = vld [vmem:[%s962 + $0xc8] sm:$0xff]
      %v989 = vld [vmem:[%s962 + $0xd0] sm:$0xff]
      %v990 = vld [vmem:[%s962 + $0xd8] sm:$0xff]
      %v991 = vld [vmem:[%s962 + $0xe0] sm:$0xff]
      %v992 = vld [vmem:[%s962 + $0xe8] sm:$0xff]
      %v993 = vld [vmem:[%s962 + $0xf0] sm:$0xff]
      %v994 = vld [vmem:[%s962 + $0xf8] sm:$0xff]
      %v995 = vld [vmem:[%s962 + $0x100] sm:$0xff]
      %v996 = vld [vmem:[%s962 + $0x108] sm:$0xff]
      %v997 = vld [vmem:[%s962 + $0x110] sm:$0xff]
      %v998 = vld [vmem:[%s962 + $0x118] sm:$0xff]
      %v999 = vld [vmem:[%s962 + $0x120] sm:$0xff]
      %v1000 = vld [vmem:[%s962 + $0x128] sm:$0xff]
      %v1001 = vld [vmem:[%s962 + $0x130] sm:$0xff]
      %v1002 = vld [vmem:[%s962 + $0x138] sm:$0xff]
      %v1003 = vld [vmem:[%s962 + $0x140] sm:$0xff]
      %v1004 = vld [vmem:[%s962 + $0x148] sm:$0xff]
      %v1005 = vld [vmem:[%s962 + $0x150] sm:$0xff]
      %v1006 = vld [vmem:[%s962 + $0x158] sm:$0xff]
      %v1007 = vld [vmem:[%s962 + $0x160] sm:$0xff]
      %v1008 = vld [vmem:[%s962 + $0x168] sm:$0xff]
      %v1009 = vld [vmem:[%s962 + $0x170] sm:$0xff]
      %v1010 = vld [vmem:[%s962 + $0x178] sm:$0xff]
      %1011 = vmatprep.subr.mxu0 0.0
      %1012 = vmatpush1.msra.mxu0 %v978
      %1013 = vmatprep.subr.mxu0 0.0
      %1014 = vmatpush1.msra.mxu0 %v977
      %1015 = vmatprep.subr.mxu0 0.0
      %1016 = vmatpush1.msra.mxu0 %v976
      %1017 = vmatprep.subr.mxu0 0.0
      %1018 = vmatpush1.msra.mxu0 %v975
      %1019 = vmatprep.subr.mxu0 0.0
      %1020 = vmatpush1.msra.mxu0 %v974
      %1021 = vmatprep.subr.mxu0 0.0
      %1022 = vmatpush1.msra.mxu0 %v973
      %1023 = vmatprep.subr.mxu0 0.0
      %1024 = vmatpush1.msra.mxu0 %v972
      %1025 = vmatprep.subr.mxu0 0.0
      %1026 = vmatpush1.msra.mxu0 %v971
      %1027 = vmatprep.subr.mxu0 0.0
      %1028 = vmatpush1.msra.mxu0 %v970
      %1029 = vmatprep.subr.mxu0 0.0
      %1030 = vmatpush1.msra.mxu0 %v969
      %1031 = vmatprep.subr.mxu0 0.0
      %1032 = vmatpush1.msra.mxu0 %v968
      %1033 = vmatprep.subr.mxu0 0.0
      %1034 = vmatpush1.msra.mxu0 %v967
      %1035 = vmatprep.subr.mxu0 0.0
      %1036 = vmatpush1.msra.mxu0 %v966
      %1037 = vmatprep.subr.mxu0 0.0
      %1038 = vmatpush1.msra.mxu0 %v965
      %1039 = vmatprep.subr.mxu0 0.0
      %1040 = vmatpush1.msra.mxu0 %v964
      %1041 = vmatprep.subr.mxu0 0.0
      %1042 = vmatpush1.msra.mxu0 %v963
      %1043 = vmatprep.subr.mxu0 0.0
      %1044 = vmatpush2.msra.mxu0 %v994
      %1045 = vmatprep.subr.mxu0 0.0
      %1046 = vmatpush2.msra.mxu0 %v993
      %1047 = vmatprep.subr.mxu0 0.0
      %1048 = vmatpush2.msra.mxu0 %v992
      %1049 = vmatprep.subr.mxu0 0.0
      %1050 = vmatpush2.msra.mxu0 %v991
      %1051 = vmatprep.subr.mxu0 0.0
      %1052 = vmatpush2.msra.mxu0 %v990
      %1053 = vmatprep.subr.mxu0 0.0
      %1054 = vmatpush2.msra.mxu0 %v989
      %1055 = vmatprep.subr.mxu0 0.0
      %1056 = vmatpush2.msra.mxu0 %v988
      %1057 = vmatprep.subr.mxu0 0.0
      %1058 = vmatpush2.msra.mxu0 %v987
      %1059 = vmatprep.subr.mxu0 0.0
      %1060 = vmatpush2.msra.mxu0 %v986
      %1061 = vmatprep.subr.mxu0 0.0
      %1062 = vmatpush2.msra.mxu0 %v985
      %1063 = vmatprep.subr.mxu0 0.0
      %1064 = vmatpush2.msra.mxu0 %v984
      %1065 = vmatprep.subr.mxu0 0.0
      %1066 = vmatpush2.msra.mxu0 %v983
      %1067 = vmatprep.subr.mxu0 0.0
      %1068 = vmatpush2.msra.mxu0 %v982
      %1069 = vmatprep.subr.mxu0 0.0
      %1070 = vmatpush2.msra.mxu0 %v981
      %1071 = vmatprep.subr.mxu0 0.0
      %1072 = vmatpush2.msra.mxu0 %v980
      %1073 = vmatprep.subr.mxu0 0.0
      %1074 = vmatpush2.msra.mxu0 %v979
      %1075 = vmatprep.mubr.f32.mxu0 %v939
      %1076 = vmatmul.mubr.f32.gmra.mxu0 %v938
      %v1077 = vpop.f32.mrf.mxu0
      %v1078 = vadd.f32 0.0, %v1077
      %v1079 = vpop.f32.mrf.mxu0
      %1080 = vmatprep.mubr.f32.mxu0 %v942
      %1081 = vmatmul.mubr.f32.gmra.mxu0 %v941
      %v1082 = vpop.f32.mrf.mxu0
      %v1083 = vadd.f32 0.0, %v1082
      %v1084 = vpop.f32.mrf.mxu0
      %1085 = vmatprep.mubr.f32.mxu0 %v945
      %1086 = vmatmul.mubr.f32.gmra.mxu0 %v944
      %v1087 = vpop.f32.mrf.mxu0
      %v1088 = vadd.f32 0.0, %v1087
      %v1089 = vpop.f32.mrf.mxu0
      %1090 = vmatprep.mubr.f32.mxu0 %v948
      %1091 = vmatmul.mubr.f32.gmra.mxu0 %v947
      %v1092 = vpop.f32.mrf.mxu0
      %v1093 = vadd.f32 0.0, %v1092
      %v1094 = vpop.f32.mrf.mxu0
      %1095 = vmatprep.mubr.f32.mxu0 %v951
      %1096 = vmatmul.mubr.f32.gmra.mxu0 %v950
      %v1097 = vpop.f32.mrf.mxu0
      %v1098 = vadd.f32 0.0, %v1097
      %v1099 = vpop.f32.mrf.mxu0
      %1100 = vmatprep.mubr.f32.mxu0 %v954
      %1101 = vmatmul.mubr.f32.gmra.mxu0 %v953
      %v1102 = vpop.f32.mrf.mxu0
      %v1103 = vadd.f32 0.0, %v1102
      %v1104 = vpop.f32.mrf.mxu0
      %1105 = vmatprep.mubr.f32.mxu0 %v957
      %1106 = vmatmul.mubr.f32.gmra.mxu0 %v956
      %v1107 = vpop.f32.mrf.mxu0
      %v1108 = vadd.f32 0.0, %v1107
      %v1109 = vpop.f32.mrf.mxu0
      %1110 = vmatprep.mubr.f32.mxu0 %v960
      %1111 = vmatmul.mubr.f32.gmra.mxu0 %v959
      %v1112 = vpop.f32.mrf.mxu0
      %v1113 = vadd.f32 0.0, %v1112
      %v1114 = vpop.f32.mrf.mxu0
      %1115 = vdwg.mxu0
      %1116 = vmatprep.subr.mxu0 0.0
      %1117 = vmatpush1.msra.mxu0 %v1010
      %1118 = vmatprep.subr.mxu0 0.0
      %1119 = vmatpush1.msra.mxu0 %v1009
      %1120 = vmatprep.subr.mxu0 0.0
      %1121 = vmatpush1.msra.mxu0 %v1008
      %1122 = vmatprep.subr.mxu0 0.0
      %1123 = vmatpush1.msra.mxu0 %v1007
      %1124 = vmatprep.subr.mxu0 0.0
      %1125 = vmatpush1.msra.mxu0 %v1006
      %1126 = vmatprep.subr.mxu0 0.0
      %1127 = vmatpush1.msra.mxu0 %v1005
      %1128 = vmatprep.subr.mxu0 0.0
      %1129 = vmatpush1.msra.mxu0 %v1004
      %1130 = vmatprep.subr.mxu0 0.0
      %1131 = vmatpush1.msra.mxu0 %v1003
      %1132 = vmatprep.subr.mxu0 0.0
      %1133 = vmatpush1.msra.mxu0 %v1002
      %1134 = vmatprep.subr.mxu0 0.0
      %1135 = vmatpush1.msra.mxu0 %v1001
      %1136 = vmatprep.subr.mxu0 0.0
      %1137 = vmatpush1.msra.mxu0 %v1000
      %1138 = vmatprep.subr.mxu0 0.0
      %1139 = vmatpush1.msra.mxu0 %v999
      %1140 = vmatprep.subr.mxu0 0.0
      %1141 = vmatpush1.msra.mxu0 %v998
      %1142 = vmatprep.subr.mxu0 0.0
      %1143 = vmatpush1.msra.mxu0 %v997
      %1144 = vmatprep.subr.mxu0 0.0
      %1145 = vmatpush1.msra.mxu0 %v996
      %1146 = vmatprep.subr.mxu0 0.0
      %1147 = vmatpush1.msra.mxu0 %v995
      %1148 = vmatprep.subr.mxu0 0.0
      %1149 = vmatpush2.msra.mxu0 0.0
      %1150 = vmatprep.subr.mxu0 0.0
      %1151 = vmatpush2.msra.mxu0 0.0
      %1152 = vmatprep.subr.mxu0 0.0
      %1153 = vmatpush2.msra.mxu0 0.0
      %1154 = vmatprep.subr.mxu0 0.0
      %1155 = vmatpush2.msra.mxu0 0.0
      %1156 = vmatprep.subr.mxu0 0.0
      %1157 = vmatpush2.msra.mxu0 0.0
      %1158 = vmatprep.subr.mxu0 0.0
      %1159 = vmatpush2.msra.mxu0 0.0
      %1160 = vmatprep.subr.mxu0 0.0
      %1161 = vmatpush2.msra.mxu0 0.0
      %1162 = vmatprep.subr.mxu0 0.0
      %1163 = vmatpush2.msra.mxu0 0.0
      %1164 = vmatprep.subr.mxu0 0.0
      %1165 = vmatpush2.msra.mxu0 0.0
      %1166 = vmatprep.subr.mxu0 0.0
      %1167 = vmatpush2.msra.mxu0 0.0
      %1168 = vmatprep.subr.mxu0 0.0
      %1169 = vmatpush2.msra.mxu0 0.0
      %1170 = vmatprep.subr.mxu0 0.0
      %1171 = vmatpush2.msra.mxu0 0.0
      %1172 = vmatprep.subr.mxu0 0.0
      %1173 = vmatpush2.msra.mxu0 0.0
      %1174 = vmatprep.subr.mxu0 0.0
      %1175 = vmatpush2.msra.mxu0 0.0
      %1176 = vmatprep.subr.mxu0 0.0
      %1177 = vmatpush2.msra.mxu0 0.0
      %1178 = vmatprep.subr.mxu0 0.0
      %1179 = vmatpush2.msra.mxu0 0.0
      %1180 = vmatprep.mubr.f32.mxu0 0.0
      %1181 = vmatmul.mubr.f32.gmra.mxu0 %v940
      %v1182 = vpop.f32.mrf.mxu0
      %v1183 = vadd.f32 %v1078, %v1182
      %v1184 = vpop.f32.mrf.mxu0
      %1185 = vmatprep.mubr.f32.mxu0 0.0
      %1186 = vmatmul.mubr.f32.gmra.mxu0 %v943
      %v1187 = vpop.f32.mrf.mxu0
      %v1188 = vadd.f32 %v1083, %v1187
      %v1189 = vpop.f32.mrf.mxu0
      %1190 = vmatprep.mubr.f32.mxu0 0.0
      %1191 = vmatmul.mubr.f32.gmra.mxu0 %v946
      %v1192 = vpop.f32.mrf.mxu0
      %v1193 = vadd.f32 %v1088, %v1192
      %v1194 = vpop.f32.mrf.mxu0
      %1195 = vmatprep.mubr.f32.mxu0 0.0
      %1196 = vmatmul.mubr.f32.gmra.mxu0 %v949
      %v1197 = vpop.f32.mrf.mxu0
      %v1198 = vadd.f32 %v1093, %v1197
      %v1199 = vpop.f32.mrf.mxu0
      %1200 = vmatprep.mubr.f32.mxu0 0.0
      %1201 = vmatmul.mubr.f32.gmra.mxu0 %v952
      %v1202 = vpop.f32.mrf.mxu0
      %v1203 = vadd.f32 %v1098, %v1202
      %v1204 = vpop.f32.mrf.mxu0
      %1205 = vmatprep.mubr.f32.mxu0 0.0
      %1206 = vmatmul.mubr.f32.gmra.mxu0 %v955
      %v1207 = vpop.f32.mrf.mxu0
      %v1208 = vadd.f32 %v1103, %v1207
      %v1209 = vpop.f32.mrf.mxu0
      %1210 = vmatprep.mubr.f32.mxu0 0.0
      %1211 = vmatmul.mubr.f32.gmra.mxu0 %v958
      %v1212 = vpop.f32.mrf.mxu0
      %v1213 = vadd.f32 %v1108, %v1212
      %v1214 = vpop.f32.mrf.mxu0
      %1215 = vmatprep.mubr.f32.mxu0 0.0
      %1216 = vmatmul.mubr.f32.gmra.mxu0 %v961
      %v1217 = vpop.f32.mrf.mxu0
      %v1218 = vadd.f32 %v1113, %v1217
      %v1219 = vpop.f32.mrf.mxu0
      %1220 = vdwg.mxu0
      %v1221 = vadd.f32 %v899, %v1183
      %v1222 = vadd.f32 %v904, %v1188
      %v1223 = vadd.f32 %v909, %v1193
      %v1224 = vadd.f32 %v914, %v1198
      %v1225 = vadd.f32 %v919, %v1203
      %v1226 = vadd.f32 %v924, %v1208
      %v1227 = vadd.f32 %v929, %v1213
      %v1228 = vadd.f32 %v934, %v1218
      %1229 = vst [vmem:[%s231] sm:$0xff] %v1221
      %1230 = vst [vmem:[%s231 + $0x8] sm:$0xff] %v1222
      %1231 = vst [vmem:[%s231 + $0x10] sm:$0xff] %v1223
      %1232 = vst [vmem:[%s231 + $0x18] sm:$0xff] %v1224
      %1233 = vst [vmem:[%s231 + $0x20] sm:$0xff] %v1225
      %1234 = vst [vmem:[%s231 + $0x28] sm:$0xff] %v1226
      %1235 = vst [vmem:[%s231 + $0x30] sm:$0xff] %v1227
      %1236 = vst [vmem:[%s231 + $0x38] sm:$0xff] %v1228
      %v1237 = vadd.f32 %v1221, %v1222
      %v1238 = vadd.f32 %v1237, %v1223
      %v1239 = vadd.f32 %v1238, %v1224
      %v1240 = vadd.f32 %v1239, %v1225
      %v1241 = vadd.f32 %v1240, %v1226
      %v1242 = vadd.f32 %v1241, %v1227
      %v1243 = vadd.f32 %v1242, %v1228
      %v1244 = vrot.slane %v1243, 4
      %v1245 = vadd.f32 %v1243, %v1244
      %v1246 = vrot.slane %v1245, 2
      %v1247 = vadd.f32 %v1245, %v1246
      %v1248 = vrot.slane %v1247, 1
      %v1249 = vadd.f32 %v1247, %v1248
      %v1250 = vmul.f32 %v1221, %v1221
      %v1251 = vmul.f32 %v1222, %v1222
      %v1252 = vmul.f32 %v1223, %v1223
      %v1253 = vmul.f32 %v1224, %v1224
      %v1254 = vmul.f32 %v1225, %v1225
      %v1255 = vmul.f32 %v1226, %v1226
      %v1256 = vmul.f32 %v1227, %v1227
      %v1257 = vmul.f32 %v1228, %v1228
      %v1258 = vadd.f32 %v1250, %v1251
      %v1259 = vadd.f32 %v1258, %v1252
      %v1260 = vadd.f32 %v1259, %v1253
      %v1261 = vadd.f32 %v1260, %v1254
      %v1262 = vadd.f32 %v1261, %v1255
      %v1263 = vadd.f32 %v1262, %v1256
      %v1264 = vadd.f32 %v1263, %v1257
      %v1265 = vrot.slane %v1264, 4
      %v1266 = vadd.f32 %v1264, %v1265
      %v1267 = vrot.slane %v1266, 2
      %v1268 = vadd.f32 %v1266, %v1267
      %v1269 = vrot.slane %v1268, 1
      %v1270 = vadd.f32 %v1268, %v1269
      %v1271 = vlaneseq
      %v1272 = vshrl.u32 %v1271, 7
      %vm1273 = vcmp.eq.s32.totalorder %v1272, 0
      %vm1274 = vcmp.eq.s32.totalorder %v1272, 1
      %v1275 = vsel %vm1274, %v1270, 0.0
      %v1276 = vsel %vm1273, %v1249, %v1275
      %1277 = vst [vmem:[%s235] sm:$0xff] %v1276
      %p1278 = scmp.lt.s32.totalorder %s17, 1
      %s1279 = scalar_select %p1278, %s17, 1
      %s1280 = smul.addr %s1279, 8
      %s1281 = smul.addr %s1280, 8
      %s1282 = scalar_lea.vmem %s4, %s1281
      %p1283 = scmp.lt.s32.totalorder %s17, 1
      %s1284 = scalar_select %p1283, %s17, 1
      %s1285 = smul.addr %s1284, 8
      %s1286 = scalar_lea.vmem %s5, %s1285
      // Predicated region
      $region37: #{block_forward_pallas.5} parent=35 // pred_check
        %p1287 = pneg %p124
      $region38: #{block_forward_pallas.5} parent=35 // pred_check_branch
        %1289 = sbr.rel (%p1287) target = $region40
      $region39: #{block_forward_pallas.5} parent=35 // pred_region
        _
      $region40: #{block_forward_pallas.5} parent=35 // pred_fallthru
        _
      // Predicated region
      $region41: #{block_forward_pallas.5} parent=35 // pred_check
        %p1290 = pneg %p150
      $region42: #{block_forward_pallas.5} parent=35 // pred_check_branch
        %1292 = sbr.rel (%p1290) target = $region44
      $region43: #{block_forward_pallas.5} parent=35 // pred_region
        _
      $region44: #{block_forward_pallas.5} parent=35 // pred_fallthru
        _
    $region36: #{block_forward_pallas.5} parent=5 // pred_fallthru
      _
    %p1293 = scmp.le.s32.totalorder 2, %s12
    // Predicated region
    $region45: #{block_forward_pallas.5} parent=5 // pred_check
      %p1294 = pneg %p1293
    $region46: #{block_forward_pallas.5} parent=5 // pred_check_branch
      %1296 = sbr.rel (%p1294) target = $region48
    $region47: #{block_forward_pallas.5} parent=5 // pred_region
      %s1297 = ssub.s32 %s12, 2
      // Predicated region
      $region49: #{block_forward_pallas.5} parent=47 // pred_check
        %p1298 = pneg %p130
      $region50: #{block_forward_pallas.5} parent=47 // pred_check_branch
        %1300 = sbr.rel (%p1298) target = $region52
      $region51: #{block_forward_pallas.5} parent=47 // pred_region
        %p1301 = scmp.lt.s32.totalorder %s18, 1
        %s1302 = scalar_select %p1301, %s18, 1
        %s1303 = smul.addr %s1302, 8
        %s1304 = smul.addr %s1303, 8
        %s1305 = scalar_lea.vmem %s4, %s1304
      $region52: #{block_forward_pallas.5} parent=47 // pred_fallthru
        _
      // Predicated region
      $region53: #{block_forward_pallas.5} parent=47 // pred_check
        %p1306 = pneg %p156
      $region54: #{block_forward_pallas.5} parent=47 // pred_check_branch
        %1308 = sbr.rel (%p1306) target = $region56
      $region55: #{block_forward_pallas.5} parent=47 // pred_region
        %p1309 = scmp.lt.s32.totalorder %s18, 1
        %s1310 = scalar_select %p1309, %s18, 1
        %s1311 = smul.addr %s1310, 8
        %s1312 = scalar_lea.vmem %s5, %s1311
      $region56: #{block_forward_pallas.5} parent=47 // pred_fallthru
        _
    $region48: #{block_forward_pallas.5} parent=5 // pred_fallthru
      _
  $region6: #{block_forward_pallas.5} parent=0 // loop_footer
    %s16 = sadd.s32 1, %s12
  $region7: #{block_forward_pallas.5} parent=0 // loop_footer_branch
    %11 = sbr.rel target = $region3
  $region8: #{block_forward_pallas.5} parent=0 // loop_exit
    _

</llo_original>
